<compile_context>
chip_gen: v7x
topology: tpu7x:2x2x1
jax: 0.10.0
libtpu: 0.0.40
codegen_flags: <defaults>
</compile_context>

<pallas_src>
import numpy as np
import jax
import jax.numpy as jnp
from jax import lax
from jax.experimental import pallas as pl
from jax.experimental.pallas import tpu as pltpu


def _make_fused_attention_kernel(num_heads, dim_head):
    H, dh = num_heads, dim_head
    HD = H * dh

    def kernel(x_ref, wqkv_ref, bias_ref, wo_ref, bo_ref, o_ref):
        x = x_ref[0]                                                # [N, C] bf16
        # One wide, lane-dense QKV projection on the MXU (scale pre-folded into Wq).
        qkv = jnp.dot(x, wqkv_ref[...],
                      preferred_element_type=jnp.float32)           # [N, 3*H*dh] f32
        bias = bias_ref[...]                                        # [N, N] f32

        head_outs = []
        for h in range(H):                    # unrolled; static lane slices of qkv
            q_h = qkv[:, h * dh:(h + 1) * dh].astype(jnp.bfloat16)
            k_h = qkv[:, HD + h * dh:HD + (h + 1) * dh].astype(jnp.bfloat16)
            v_h = qkv[:, 2 * HD + h * dh:2 * HD + (h + 1) * dh].astype(jnp.bfloat16)
            # scores = q_h @ k_h^T  (contract last dims; no explicit transpose)
            s = lax.dot_general(q_h, k_h, (((1,), (1,)), ((), ())),
                                preferred_element_type=jnp.float32)  # [N, N]
            s = s + bias
            # f32 softmax; reciprocal goes to the EUP slot instead of a VALU divide.
            m = jnp.max(s, axis=-1, keepdims=True)
            p = jnp.exp(s - m)
            l = jnp.sum(p, axis=-1, keepdims=True)
            attn = (p * pl.reciprocal(l, approx=True)).astype(jnp.bfloat16)
            head_outs.append(
                jnp.dot(attn, v_h, preferred_element_type=jnp.float32))  # [N, dh]

        # Deferred output projection: one K = H*dh matmul over the head concat.
        o_heads = jnp.concatenate(head_outs, axis=-1).astype(jnp.bfloat16)  # [N, H*dh]
        out = jnp.dot(o_heads, wo_ref[...],
                      preferred_element_type=jnp.float32)                   # [N, oup_pad]
        o_ref[0] = (out + bo_ref[...]).astype(o_ref.dtype)

    return kernel


def fused_attention(x, w_qkv, attn_bias, w_out, b_out, *, heads, dim_head):
    """x:[B,N,C]  w_qkv:[C,3*H*dh] bf16 (scale folded into Q cols)
       attn_bias:[N,N] f32  w_out:[H*dh, oup_pad] bf16  b_out:[1, oup_pad] f32."""
    B, N, C = x.shape
    out_dtype = x.dtype
    three_hd = w_qkv.shape[1]
    hd = heads * dim_head
    oup_pad = w_out.shape[1]
    kernel = _make_fused_attention_kernel(heads, dim_head)
    return pl.pallas_call(
        kernel,
        out_shape=jax.ShapeDtypeStruct((B, N, oup_pad), out_dtype),
        grid=(B,),
        in_specs=[
            pl.BlockSpec((1, N, C), lambda b: (b, 0, 0)),       # x (per batch element)
            pl.BlockSpec((C, three_hd), lambda b: (0, 0)),      # W_qkv (grid-resident)
            pl.BlockSpec((N, N), lambda b: (0, 0)),             # relative bias (resident)
            pl.BlockSpec((hd, oup_pad), lambda b: (0, 0)),      # W_out (resident)
            pl.BlockSpec((1, oup_pad), lambda b: (0, 0)),       # b_out (resident)
        ],
        out_specs=pl.BlockSpec((1, N, oup_pad), lambda b: (b, 0, 0)),
        compiler_params=pltpu.CompilerParams(
            dimension_semantics=("parallel",),
            # Tiny footprint at this config; for large N re-derive per generation
            # (<= ~48 MiB on v7x's 64 MiB VMEM; up to 64-96 MiB on v5e/v6e).
            vmem_limit_bytes=32 * 1024 * 1024,
        ),
    )(x.astype(jnp.bfloat16), w_qkv, attn_bias, w_out, b_out)


def _build_relative_pos(idp, ih, iw):
    # Mirrors torch.meshgrid ('ij') + flatten + pairwise diff + flatten index.
    g = np.meshgrid(np.arange(idp), np.arange(ih), np.arange(iw), indexing="ij")
    coords = np.stack(g).reshape(3, -1).T                       # [N, 3]
    rel = coords[:, None, :] - coords[None, :, :]                # [N, N, 3]
    rel = rel[:, :, 0] * ih * iw + rel[:, :, 1] * iw + rel[:, :, 2]
    rel = rel - rel.min()
    return rel.astype(np.int32)                                  # [N, N]


class AttentionPallas:
    """JAX/Pallas port of Attention(inp, oup, image_size, heads, dim_head, dropout)."""

    def __init__(self, inp, oup, image_size, heads=8, dim_head=32, dropout=0.0,
                 key=None):
        if key is None:
            key = jax.random.PRNGKey(0)
        inner_dim = dim_head * heads
        self.heads = heads
        self.dim_head = dim_head
        self.scale = dim_head ** (-0.5)
        self.id, self.ih, self.iw = image_size
        n_tokens = self.id * self.ih * self.iw
        project_out = not (heads == 1 and dim_head == inp)

        k0, k1, k2, k3 = jax.random.split(key, 4)
        # to_qkv: Linear(inp, 3*inner_dim, bias=False); columns ordered (c, h, l).
        w_qkv = jax.random.normal(k0, (inp, 3 * inner_dim), jnp.float32) * (inp ** -0.5)
        # relative_bias_table: Embedding(n_tokens*8, 1).  The gather at relative_pos
        # is batch-independent, so it is precomputed here in plain JAX.
        bias_table = jax.random.normal(k1, (n_tokens * 8,), jnp.float32)
        rel = _build_relative_pos(self.id, self.ih, self.iw)
        self.attn_bias = jnp.take(bias_table, jnp.asarray(rel), axis=0)     # [N, N]

        if project_out:
            w_out = jax.random.normal(k2, (inner_dim, oup), jnp.float32) * (inner_dim ** -0.5)
            b_out = jax.random.normal(k3, (oup,), jnp.float32) * 0.1
        else:
            # to_out == Identity: identity weight + zero bias reuses the same path.
            w_out = jnp.eye(inner_dim, dtype=jnp.float32)
            b_out = jnp.zeros((inner_dim,), jnp.float32)
        # TODO(synk): nn.Dropout in to_out is eval-mode identity here (p=0.0).

        # f32 copies for the pure-JAX reference.
        self.w_qkv = w_qkv
        self.w_out = w_out
        self.b_out = b_out

        # --- Kernel operands ---
        # scale folded into the Q columns; bf16 for native-rate MXU + half DMA bytes.
        w_qkv_scaled = w_qkv.at[:, :inner_dim].multiply(self.scale)
        self.w_qkv_k = w_qkv_scaled.astype(jnp.bfloat16)                    # [C, 3*H*dh]
        # Output projection padded to a lane-dense (multiple-of-128) last dim.
        out_dim = w_out.shape[-1]
        self.oup = out_dim
        oup_pad = ((out_dim + 127) // 128) * 128
        wo_p = jnp.zeros((inner_dim, oup_pad), jnp.float32).at[:, :out_dim].set(w_out)
        bo_p = jnp.zeros((1, oup_pad), jnp.float32).at[0, :out_dim].set(b_out)
        self.w_out_k = wo_p.astype(jnp.bfloat16)                            # [H*dh, oup_pad]
        self.b_out_k = bo_p                                                  # f32

    def __call__(self, x):
        # TODO(synk): for large N (= id*ih*iw) the [N,N] score/bias tiles should be
        # flash-tiled over key blocks (especially on v7x's 64 MiB VMEM); full-N here.
        # TODO(synk): if B can be 1 on v7x, add a parallel query-tile grid axis so
        # both TensorCores get work.
        out = fused_attention(x, self.w_qkv_k, self.attn_bias, self.w_out_k,
                              self.b_out_k, heads=self.heads, dim_head=self.dim_head)
        return out[..., :self.oup]


def attention_reference(x, mod):
    """Pure-JAX f32 mirror of the PyTorch forward (for correctness checking)."""
    B, N, _ = x.shape
    H, dh = mod.heads, mod.dim_head
    qkv = x @ mod.w_qkv                                       # [B, N, 3*H*dh]
    qkv = qkv.reshape(B, N, 3, H, dh).transpose(2, 0, 3, 1, 4)
    q, k, v = qkv[0] * mod.scale, qkv[1], qkv[2]              # [B, H, N, dh]
    attn = jnp.einsum("bhnd,bhmd->bhnm", q, k) + mod.attn_bias[None, None]
    attn = jax.nn.softmax(attn, axis=-1)
    out = jnp.einsum("bhnm,bhmd->bhnd", attn, v)
    out = out.transpose(0, 2, 1, 3).reshape(B, N, H * dh)
    return out @ mod.w_out + mod.b_out


if __name__ == "__main__":
    # Small config consistent with the module: image_size=(2,2,4) -> N = 16,
    # inp = oup = 32, heads = 8, dim_head = 32 (defaults), batch = 2.
    inp, oup = 32, 32
    image_size = (2, 2, 4)
    heads, dim_head = 8, 32
    B = 2
    N = image_size[0] * image_size[1] * image_size[2]

    key = jax.random.PRNGKey(0)
    kx, kp = jax.random.split(key)
    x = jax.random.normal(kx, (B, N, inp), dtype=jnp.float32)

    module = AttentionPallas(inp, oup, image_size, heads=heads, dim_head=dim_head,
                             dropout=0.0, key=kp)

    out = module(x)
    out = jax.block_until_ready(out)

    ref = attention_reference(x, module)
    assert out.shape == ref.shape, (out.shape, ref.shape)
    # Tolerance covers bf16 MXU operands in the kernel vs the f32 XLA reference
    # (recommended perf path); accumulation / softmax remain f32 in the kernel.
    assert np.allclose(np.asarray(out), np.asarray(ref), atol=5e-2, rtol=5e-2), (
        float(jnp.max(jnp.abs(out - ref))))

    print("KERNEL_OK")
</pallas_src>

<mosaic_0001>
module attributes {stable_mosaic.version = 11 : i64} {
  func.func @kernel(%arg0: i32, %arg1: memref<1x16x32xbf16, #tpu.memory_space<vmem>>, %arg2: memref<32x768xbf16, #tpu.memory_space<vmem>>, %arg3: memref<16x16xf32, #tpu.memory_space<vmem>>, %arg4: memref<256x128xbf16, #tpu.memory_space<vmem>>, %arg5: memref<1x128xf32, #tpu.memory_space<vmem>>, %arg6: memref<1x16x128xf32, #tpu.memory_space<vmem>>) attributes {dimension_semantics = [#tpu.dimension_semantics<parallel>], iteration_bounds = array<i64: 2>, scalar_prefetch = 0 : i64, scratch_operands = 0 : i64, tpu.core_type = #tpu.core_type<tc>, window_params = [{transform_indices = @transform_0, window_bounds = array<i64: 1, 16, 32>}, {pipeline_mode = #tpu.pipeline_mode<synchronous>, transform_indices = @transform_1, window_bounds = array<i64: 32, 768>}, {pipeline_mode = #tpu.pipeline_mode<synchronous>, transform_indices = @transform_2, window_bounds = array<i64: 16, 16>}, {pipeline_mode = #tpu.pipeline_mode<synchronous>, transform_indices = @transform_3, window_bounds = array<i64: 256, 128>}, {pipeline_mode = #tpu.pipeline_mode<synchronous>, transform_indices = @transform_4, window_bounds = array<i64: 1, 128>}, {transform_indices = @transform_5, window_bounds = array<i64: 1, 16, 128>}]} {
    %c0 = arith.constant 0 : index
    %c0_0 = arith.constant 0 : index
    %c0_1 = arith.constant 0 : index
    %0 = vector.load %arg1[%c0, %c0_0, %c0_1] : memref<1x16x32xbf16, #tpu.memory_space<vmem>>, vector<1x16x32xbf16>
    %1 = vector.shape_cast %0 : vector<1x16x32xbf16> to vector<16x32xbf16>
    %c0_2 = arith.constant 0 : index
    %c0_3 = arith.constant 0 : index
    %2 = vector.load %arg2[%c0_2, %c0_3] : memref<32x768xbf16, #tpu.memory_space<vmem>>, vector<32x768xbf16>
    %cst = arith.constant dense<0.000000e+00> : vector<16x768xf32>
    %3 = tpu.matmul %1, %2, %cst {dimension_numbers = #tpu.dot_dimension_numbers<[1], [0], [0], [1], [0, 0, 1, 1], [], []>} : vector<16x32xbf16>, vector<32x768xbf16>, vector<16x768xf32> -> vector<16x768xf32>
    %c0_4 = arith.constant 0 : index
    %c0_5 = arith.constant 0 : index
    %4 = vector.load %arg3[%c0_4, %c0_5] : memref<16x16xf32, #tpu.memory_space<vmem>>, vector<16x16xf32>
    %5 = vector.extract_strided_slice %3 {offsets = [0, 0], sizes = [16, 32], strides = [1, 1]} : vector<16x768xf32> to vector<16x32xf32>
    %6 = arith.truncf %5 : vector<16x32xf32> to vector<16x32xbf16>
    %7 = vector.extract_strided_slice %3 {offsets = [0, 256], sizes = [16, 32], strides = [1, 1]} : vector<16x768xf32> to vector<16x32xf32>
    %8 = arith.truncf %7 : vector<16x32xf32> to vector<16x32xbf16>
    %9 = vector.extract_strided_slice %3 {offsets = [0, 512], sizes = [16, 32], strides = [1, 1]} : vector<16x768xf32> to vector<16x32xf32>
    %10 = arith.truncf %9 : vector<16x32xf32> to vector<16x32xbf16>
    %cst_6 = arith.constant dense<0.000000e+00> : vector<16x16xf32>
    %11 = tpu.matmul %6, %8, %cst_6 {dimension_numbers = #tpu.dot_dimension_numbers<[1], [1], [0], [0], [0, 0, 1, 0], [], []>} : vector<16x32xbf16>, vector<16x32xbf16>, vector<16x16xf32> -> vector<16x16xf32>
    %12 = arith.addf %11, %4 : vector<16x16xf32>
    %cst_7 = arith.constant dense<0xFF800000> : vector<16xf32>
    %13 = vector.multi_reduction <maximumf>, %12, %cst_7 [1] : vector<16x16xf32> to vector<16xf32>
    %14 = vector.shape_cast %13 : vector<16xf32> to vector<16x1xf32>
    %15 = vector.broadcast %14 : vector<16x1xf32> to vector<16x16xf32>
    %16 = arith.subf %12, %15 : vector<16x16xf32>
    %17 = math.exp %16 : vector<16x16xf32>
    %cst_8 = arith.constant dense<0.000000e+00> : vector<16xf32>
    %18 = vector.multi_reduction <add>, %17, %cst_8 [1] : vector<16x16xf32> to vector<16xf32>
    %19 = vector.shape_cast %18 : vector<16xf32> to vector<16x1xf32>
    %20 = tpu.reciprocal %19 {approx = true} : vector<16x1xf32> -> vector<16x1xf32>
    %21 = vector.broadcast %20 : vector<16x1xf32> to vector<16x16xf32>
    %22 = arith.mulf %17, %21 : vector<16x16xf32>
    %23 = arith.truncf %22 : vector<16x16xf32> to vector<16x16xbf16>
    %cst_9 = arith.constant dense<0.000000e+00> : vector<16x32xf32>
    %24 = tpu.matmul %23, %10, %cst_9 {dimension_numbers = #tpu.dot_dimension_numbers<[1], [0], [0], [1], [0, 0, 1, 1], [], []>} : vector<16x16xbf16>, vector<16x32xbf16>, vector<16x32xf32> -> vector<16x32xf32>
    %25 = vector.extract_strided_slice %3 {offsets = [0, 32], sizes = [16, 32], strides = [1, 1]} : vector<16x768xf32> to vector<16x32xf32>
    %26 = arith.truncf %25 : vector<16x32xf32> to vector<16x32xbf16>
    %27 = vector.extract_strided_slice %3 {offsets = [0, 288], sizes = [16, 32], strides = [1, 1]} : vector<16x768xf32> to vector<16x32xf32>
    %28 = arith.truncf %27 : vector<16x32xf32> to vector<16x32xbf16>
    %29 = vector.extract_strided_slice %3 {offsets = [0, 544], sizes = [16, 32], strides = [1, 1]} : vector<16x768xf32> to vector<16x32xf32>
    %30 = arith.truncf %29 : vector<16x32xf32> to vector<16x32xbf16>
    %cst_10 = arith.constant dense<0.000000e+00> : vector<16x16xf32>
    %31 = tpu.matmul %26, %28, %cst_10 {dimension_numbers = #tpu.dot_dimension_numbers<[1], [1], [0], [0], [0, 0, 1, 0], [], []>} : vector<16x32xbf16>, vector<16x32xbf16>, vector<16x16xf32> -> vector<16x16xf32>
    %32 = arith.addf %31, %4 : vector<16x16xf32>
    %cst_11 = arith.constant dense<0xFF800000> : vector<16xf32>
    %33 = vector.multi_reduction <maximumf>, %32, %cst_11 [1] : vector<16x16xf32> to vector<16xf32>
    %34 = vector.shape_cast %33 : vector<16xf32> to vector<16x1xf32>
    %35 = vector.broadcast %34 : vector<16x1xf32> to vector<16x16xf32>
    %36 = arith.subf %32, %35 : vector<16x16xf32>
    %37 = math.exp %36 : vector<16x16xf32>
    %cst_12 = arith.constant dense<0.000000e+00> : vector<16xf32>
    %38 = vector.multi_reduction <add>, %37, %cst_12 [1] : vector<16x16xf32> to vector<16xf32>
    %39 = vector.shape_cast %38 : vector<16xf32> to vector<16x1xf32>
    %40 = tpu.reciprocal %39 {approx = true} : vector<16x1xf32> -> vector<16x1xf32>
    %41 = vector.broadcast %40 : vector<16x1xf32> to vector<16x16xf32>
    %42 = arith.mulf %37, %41 : vector<16x16xf32>
    %43 = arith.truncf %42 : vector<16x16xf32> to vector<16x16xbf16>
    %cst_13 = arith.constant dense<0.000000e+00> : vector<16x32xf32>
    %44 = tpu.matmul %43, %30, %cst_13 {dimension_numbers = #tpu.dot_dimension_numbers<[1], [0], [0], [1], [0, 0, 1, 1], [], []>} : vector<16x16xbf16>, vector<16x32xbf16>, vector<16x32xf32> -> vector<16x32xf32>
    %45 = vector.extract_strided_slice %3 {offsets = [0, 64], sizes = [16, 32], strides = [1, 1]} : vector<16x768xf32> to vector<16x32xf32>
    %46 = arith.truncf %45 : vector<16x32xf32> to vector<16x32xbf16>
    %47 = vector.extract_strided_slice %3 {offsets = [0, 320], sizes = [16, 32], strides = [1, 1]} : vector<16x768xf32> to vector<16x32xf32>
    %48 = arith.truncf %47 : vector<16x32xf32> to vector<16x32xbf16>
    %49 = vector.extract_strided_slice %3 {offsets = [0, 576], sizes = [16, 32], strides = [1, 1]} : vector<16x768xf32> to vector<16x32xf32>
    %50 = arith.truncf %49 : vector<16x32xf32> to vector<16x32xbf16>
    %cst_14 = arith.constant dense<0.000000e+00> : vector<16x16xf32>
    %51 = tpu.matmul %46, %48, %cst_14 {dimension_numbers = #tpu.dot_dimension_numbers<[1], [1], [0], [0], [0, 0, 1, 0], [], []>} : vector<16x32xbf16>, vector<16x32xbf16>, vector<16x16xf32> -> vector<16x16xf32>
    %52 = arith.addf %51, %4 : vector<16x16xf32>
    %cst_15 = arith.constant dense<0xFF800000> : vector<16xf32>
    %53 = vector.multi_reduction <maximumf>, %52, %cst_15 [1] : vector<16x16xf32> to vector<16xf32>
    %54 = vector.shape_cast %53 : vector<16xf32> to vector<16x1xf32>
    %55 = vector.broadcast %54 : vector<16x1xf32> to vector<16x16xf32>
    %56 = arith.subf %52, %55 : vector<16x16xf32>
    %57 = math.exp %56 : vector<16x16xf32>
    %cst_16 = arith.constant dense<0.000000e+00> : vector<16xf32>
    %58 = vector.multi_reduction <add>, %57, %cst_16 [1] : vector<16x16xf32> to vector<16xf32>
    %59 = vector.shape_cast %58 : vector<16xf32> to vector<16x1xf32>
    %60 = tpu.reciprocal %59 {approx = true} : vector<16x1xf32> -> vector<16x1xf32>
    %61 = vector.broadcast %60 : vector<16x1xf32> to vector<16x16xf32>
    %62 = arith.mulf %57, %61 : vector<16x16xf32>
    %63 = arith.truncf %62 : vector<16x16xf32> to vector<16x16xbf16>
    %cst_17 = arith.constant dense<0.000000e+00> : vector<16x32xf32>
    %64 = tpu.matmul %63, %50, %cst_17 {dimension_numbers = #tpu.dot_dimension_numbers<[1], [0], [0], [1], [0, 0, 1, 1], [], []>} : vector<16x16xbf16>, vector<16x32xbf16>, vector<16x32xf32> -> vector<16x32xf32>
    %65 = vector.extract_strided_slice %3 {offsets = [0, 96], sizes = [16, 32], strides = [1, 1]} : vector<16x768xf32> to vector<16x32xf32>
    %66 = arith.truncf %65 : vector<16x32xf32> to vector<16x32xbf16>
    %67 = vector.extract_strided_slice %3 {offsets = [0, 352], sizes = [16, 32], strides = [1, 1]} : vector<16x768xf32> to vector<16x32xf32>
    %68 = arith.truncf %67 : vector<16x32xf32> to vector<16x32xbf16>
    %69 = vector.extract_strided_slice %3 {offsets = [0, 608], sizes = [16, 32], strides = [1, 1]} : vector<16x768xf32> to vector<16x32xf32>
    %70 = arith.truncf %69 : vector<16x32xf32> to vector<16x32xbf16>
    %cst_18 = arith.constant dense<0.000000e+00> : vector<16x16xf32>
    %71 = tpu.matmul %66, %68, %cst_18 {dimension_numbers = #tpu.dot_dimension_numbers<[1], [1], [0], [0], [0, 0, 1, 0], [], []>} : vector<16x32xbf16>, vector<16x32xbf16>, vector<16x16xf32> -> vector<16x16xf32>
    %72 = arith.addf %71, %4 : vector<16x16xf32>
    %cst_19 = arith.constant dense<0xFF800000> : vector<16xf32>
    %73 = vector.multi_reduction <maximumf>, %72, %cst_19 [1] : vector<16x16xf32> to vector<16xf32>
    %74 = vector.shape_cast %73 : vector<16xf32> to vector<16x1xf32>
    %75 = vector.broadcast %74 : vector<16x1xf32> to vector<16x16xf32>
    %76 = arith.subf %72, %75 : vector<16x16xf32>
    %77 = math.exp %76 : vector<16x16xf32>
    %cst_20 = arith.constant dense<0.000000e+00> : vector<16xf32>
    %78 = vector.multi_reduction <add>, %77, %cst_20 [1] : vector<16x16xf32> to vector<16xf32>
    %79 = vector.shape_cast %78 : vector<16xf32> to vector<16x1xf32>
    %80 = tpu.reciprocal %79 {approx = true} : vector<16x1xf32> -> vector<16x1xf32>
    %81 = vector.broadcast %80 : vector<16x1xf32> to vector<16x16xf32>
    %82 = arith.mulf %77, %81 : vector<16x16xf32>
    %83 = arith.truncf %82 : vector<16x16xf32> to vector<16x16xbf16>
    %cst_21 = arith.constant dense<0.000000e+00> : vector<16x32xf32>
    %84 = tpu.matmul %83, %70, %cst_21 {dimension_numbers = #tpu.dot_dimension_numbers<[1], [0], [0], [1], [0, 0, 1, 1], [], []>} : vector<16x16xbf16>, vector<16x32xbf16>, vector<16x32xf32> -> vector<16x32xf32>
    %85 = vector.extract_strided_slice %3 {offsets = [0, 128], sizes = [16, 32], strides = [1, 1]} : vector<16x768xf32> to vector<16x32xf32>
    %86 = arith.truncf %85 : vector<16x32xf32> to vector<16x32xbf16>
    %87 = vector.extract_strided_slice %3 {offsets = [0, 384], sizes = [16, 32], strides = [1, 1]} : vector<16x768xf32> to vector<16x32xf32>
    %88 = arith.truncf %87 : vector<16x32xf32> to vector<16x32xbf16>
    %89 = vector.extract_strided_slice %3 {offsets = [0, 640], sizes = [16, 32], strides = [1, 1]} : vector<16x768xf32> to vector<16x32xf32>
    %90 = arith.truncf %89 : vector<16x32xf32> to vector<16x32xbf16>
    %cst_22 = arith.constant dense<0.000000e+00> : vector<16x16xf32>
    %91 = tpu.matmul %86, %88, %cst_22 {dimension_numbers = #tpu.dot_dimension_numbers<[1], [1], [0], [0], [0, 0, 1, 0], [], []>} : vector<16x32xbf16>, vector<16x32xbf16>, vector<16x16xf32> -> vector<16x16xf32>
    %92 = arith.addf %91, %4 : vector<16x16xf32>
    %cst_23 = arith.constant dense<0xFF800000> : vector<16xf32>
    %93 = vector.multi_reduction <maximumf>, %92, %cst_23 [1] : vector<16x16xf32> to vector<16xf32>
    %94 = vector.shape_cast %93 : vector<16xf32> to vector<16x1xf32>
    %95 = vector.broadcast %94 : vector<16x1xf32> to vector<16x16xf32>
    %96 = arith.subf %92, %95 : vector<16x16xf32>
    %97 = math.exp %96 : vector<16x16xf32>
    %cst_24 = arith.constant dense<0.000000e+00> : vector<16xf32>
    %98 = vector.multi_reduction <add>, %97, %cst_24 [1] : vector<16x16xf32> to vector<16xf32>
    %99 = vector.shape_cast %98 : vector<16xf32> to vector<16x1xf32>
    %100 = tpu.reciprocal %99 {approx = true} : vector<16x1xf32> -> vector<16x1xf32>
    %101 = vector.broadcast %100 : vector<16x1xf32> to vector<16x16xf32>
    %102 = arith.mulf %97, %101 : vector<16x16xf32>
    %103 = arith.truncf %102 : vector<16x16xf32> to vector<16x16xbf16>
    %cst_25 = arith.constant dense<0.000000e+00> : vector<16x32xf32>
    %104 = tpu.matmul %103, %90, %cst_25 {dimension_numbers = #tpu.dot_dimension_numbers<[1], [0], [0], [1], [0, 0, 1, 1], [], []>} : vector<16x16xbf16>, vector<16x32xbf16>, vector<16x32xf32> -> vector<16x32xf32>
    %105 = vector.extract_strided_slice %3 {offsets = [0, 160], sizes = [16, 32], strides = [1, 1]} : vector<16x768xf32> to vector<16x32xf32>
    %106 = arith.truncf %105 : vector<16x32xf32> to vector<16x32xbf16>
    %107 = vector.extract_strided_slice %3 {offsets = [0, 416], sizes = [16, 32], strides = [1, 1]} : vector<16x768xf32> to vector<16x32xf32>
    %108 = arith.truncf %107 : vector<16x32xf32> to vector<16x32xbf16>
    %109 = vector.extract_strided_slice %3 {offsets = [0, 672], sizes = [16, 32], strides = [1, 1]} : vector<16x768xf32> to vector<16x32xf32>
    %110 = arith.truncf %109 : vector<16x32xf32> to vector<16x32xbf16>
    %cst_26 = arith.constant dense<0.000000e+00> : vector<16x16xf32>
    %111 = tpu.matmul %106, %108, %cst_26 {dimension_numbers = #tpu.dot_dimension_numbers<[1], [1], [0], [0], [0, 0, 1, 0], [], []>} : vector<16x32xbf16>, vector<16x32xbf16>, vector<16x16xf32> -> vector<16x16xf32>
    %112 = arith.addf %111, %4 : vector<16x16xf32>
    %cst_27 = arith.constant dense<0xFF800000> : vector<16xf32>
    %113 = vector.multi_reduction <maximumf>, %112, %cst_27 [1] : vector<16x16xf32> to vector<16xf32>
    %114 = vector.shape_cast %113 : vector<16xf32> to vector<16x1xf32>
    %115 = vector.broadcast %114 : vector<16x1xf32> to vector<16x16xf32>
    %116 = arith.subf %112, %115 : vector<16x16xf32>
    %117 = math.exp %116 : vector<16x16xf32>
    %cst_28 = arith.constant dense<0.000000e+00> : vector<16xf32>
    %118 = vector.multi_reduction <add>, %117, %cst_28 [1] : vector<16x16xf32> to vector<16xf32>
    %119 = vector.shape_cast %118 : vector<16xf32> to vector<16x1xf32>
    %120 = tpu.reciprocal %119 {approx = true} : vector<16x1xf32> -> vector<16x1xf32>
    %121 = vector.broadcast %120 : vector<16x1xf32> to vector<16x16xf32>
    %122 = arith.mulf %117, %121 : vector<16x16xf32>
    %123 = arith.truncf %122 : vector<16x16xf32> to vector<16x16xbf16>
    %cst_29 = arith.constant dense<0.000000e+00> : vector<16x32xf32>
    %124 = tpu.matmul %123, %110, %cst_29 {dimension_numbers = #tpu.dot_dimension_numbers<[1], [0], [0], [1], [0, 0, 1, 1], [], []>} : vector<16x16xbf16>, vector<16x32xbf16>, vector<16x32xf32> -> vector<16x32xf32>
    %125 = vector.extract_strided_slice %3 {offsets = [0, 192], sizes = [16, 32], strides = [1, 1]} : vector<16x768xf32> to vector<16x32xf32>
    %126 = arith.truncf %125 : vector<16x32xf32> to vector<16x32xbf16>
    %127 = vector.extract_strided_slice %3 {offsets = [0, 448], sizes = [16, 32], strides = [1, 1]} : vector<16x768xf32> to vector<16x32xf32>
    %128 = arith.truncf %127 : vector<16x32xf32> to vector<16x32xbf16>
    %129 = vector.extract_strided_slice %3 {offsets = [0, 704], sizes = [16, 32], strides = [1, 1]} : vector<16x768xf32> to vector<16x32xf32>
    %130 = arith.truncf %129 : vector<16x32xf32> to vector<16x32xbf16>
    %cst_30 = arith.constant dense<0.000000e+00> : vector<16x16xf32>
    %131 = tpu.matmul %126, %128, %cst_30 {dimension_numbers = #tpu.dot_dimension_numbers<[1], [1], [0], [0], [0, 0, 1, 0], [], []>} : vector<16x32xbf16>, vector<16x32xbf16>, vector<16x16xf32> -> vector<16x16xf32>
    %132 = arith.addf %131, %4 : vector<16x16xf32>
    %cst_31 = arith.constant dense<0xFF800000> : vector<16xf32>
    %133 = vector.multi_reduction <maximumf>, %132, %cst_31 [1] : vector<16x16xf32> to vector<16xf32>
    %134 = vector.shape_cast %133 : vector<16xf32> to vector<16x1xf32>
    %135 = vector.broadcast %134 : vector<16x1xf32> to vector<16x16xf32>
    %136 = arith.subf %132, %135 : vector<16x16xf32>
    %137 = math.exp %136 : vector<16x16xf32>
    %cst_32 = arith.constant dense<0.000000e+00> : vector<16xf32>
    %138 = vector.multi_reduction <add>, %137, %cst_32 [1] : vector<16x16xf32> to vector<16xf32>
    %139 = vector.shape_cast %138 : vector<16xf32> to vector<16x1xf32>
    %140 = tpu.reciprocal %139 {approx = true} : vector<16x1xf32> -> vector<16x1xf32>
    %141 = vector.broadcast %140 : vector<16x1xf32> to vector<16x16xf32>
    %142 = arith.mulf %137, %141 : vector<16x16xf32>
    %143 = arith.truncf %142 : vector<16x16xf32> to vector<16x16xbf16>
    %cst_33 = arith.constant dense<0.000000e+00> : vector<16x32xf32>
    %144 = tpu.matmul %143, %130, %cst_33 {dimension_numbers = #tpu.dot_dimension_numbers<[1], [0], [0], [1], [0, 0, 1, 1], [], []>} : vector<16x16xbf16>, vector<16x32xbf16>, vector<16x32xf32> -> vector<16x32xf32>
    %145 = vector.extract_strided_slice %3 {offsets = [0, 224], sizes = [16, 32], strides = [1, 1]} : vector<16x768xf32> to vector<16x32xf32>
    %146 = arith.truncf %145 : vector<16x32xf32> to vector<16x32xbf16>
    %147 = vector.extract_strided_slice %3 {offsets = [0, 480], sizes = [16, 32], strides = [1, 1]} : vector<16x768xf32> to vector<16x32xf32>
    %148 = arith.truncf %147 : vector<16x32xf32> to vector<16x32xbf16>
    %149 = vector.extract_strided_slice %3 {offsets = [0, 736], sizes = [16, 32], strides = [1, 1]} : vector<16x768xf32> to vector<16x32xf32>
    %150 = arith.truncf %149 : vector<16x32xf32> to vector<16x32xbf16>
    %cst_34 = arith.constant dense<0.000000e+00> : vector<16x16xf32>
    %151 = tpu.matmul %146, %148, %cst_34 {dimension_numbers = #tpu.dot_dimension_numbers<[1], [1], [0], [0], [0, 0, 1, 0], [], []>} : vector<16x32xbf16>, vector<16x32xbf16>, vector<16x16xf32> -> vector<16x16xf32>
    %152 = arith.addf %151, %4 : vector<16x16xf32>
    %cst_35 = arith.constant dense<0xFF800000> : vector<16xf32>
    %153 = vector.multi_reduction <maximumf>, %152, %cst_35 [1] : vector<16x16xf32> to vector<16xf32>
    %154 = vector.shape_cast %153 : vector<16xf32> to vector<16x1xf32>
    %155 = vector.broadcast %154 : vector<16x1xf32> to vector<16x16xf32>
    %156 = arith.subf %152, %155 : vector<16x16xf32>
    %157 = math.exp %156 : vector<16x16xf32>
    %cst_36 = arith.constant dense<0.000000e+00> : vector<16xf32>
    %158 = vector.multi_reduction <add>, %157, %cst_36 [1] : vector<16x16xf32> to vector<16xf32>
    %159 = vector.shape_cast %158 : vector<16xf32> to vector<16x1xf32>
    %160 = tpu.reciprocal %159 {approx = true} : vector<16x1xf32> -> vector<16x1xf32>
    %161 = vector.broadcast %160 : vector<16x1xf32> to vector<16x16xf32>
    %162 = arith.mulf %157, %161 : vector<16x16xf32>
    %163 = arith.truncf %162 : vector<16x16xf32> to vector<16x16xbf16>
    %cst_37 = arith.constant dense<0.000000e+00> : vector<16x32xf32>
    %164 = tpu.matmul %163, %150, %cst_37 {dimension_numbers = #tpu.dot_dimension_numbers<[1], [0], [0], [1], [0, 0, 1, 1], [], []>} : vector<16x16xbf16>, vector<16x32xbf16>, vector<16x32xf32> -> vector<16x32xf32>
    %165 = tpu.concatenate %24, %44, %64, %84, %104, %124, %144, %164 in 1 : vector<16x32xf32>, vector<16x32xf32>, vector<16x32xf32>, vector<16x32xf32>, vector<16x32xf32>, vector<16x32xf32>, vector<16x32xf32>, vector<16x32xf32> -> vector<16x256xf32>
    %166 = arith.truncf %165 : vector<16x256xf32> to vector<16x256xbf16>
    %c0_38 = arith.constant 0 : index
    %c0_39 = arith.constant 0 : index
    %167 = vector.load %arg4[%c0_38, %c0_39] : memref<256x128xbf16, #tpu.memory_space<vmem>>, vector<256x128xbf16>
    %cst_40 = arith.constant dense<0.000000e+00> : vector<16x128xf32>
    %168 = tpu.matmul %166, %167, %cst_40 {dimension_numbers = #tpu.dot_dimension_numbers<[1], [0], [0], [1], [0, 0, 1, 1], [], []>} : vector<16x256xbf16>, vector<256x128xbf16>, vector<16x128xf32> -> vector<16x128xf32>
    %c0_41 = arith.constant 0 : index
    %c0_42 = arith.constant 0 : index
    %169 = vector.load %arg5[%c0_41, %c0_42] : memref<1x128xf32, #tpu.memory_space<vmem>>, vector<1x128xf32>
    %170 = vector.broadcast %169 : vector<1x128xf32> to vector<16x128xf32>
    %171 = arith.addf %168, %170 : vector<16x128xf32>
    %c0_43 = arith.constant 0 : index
    %c0_44 = arith.constant 0 : index
    %c0_45 = arith.constant 0 : index
    %172 = vector.load %arg6[%c0_43, %c0_44, %c0_45] : memref<1x16x128xf32, #tpu.memory_space<vmem>>, vector<1x16x128xf32>
    %173 = vector.shape_cast %172 : vector<1x16x128xf32> to vector<16x128xf32>
    %174 = vector.shape_cast %171 : vector<16x128xf32> to vector<1x16x128xf32>
    tpu.vector_store %arg6[%c0_43, %c0_44, %c0_45], %174 {strides = array<i32>} : memref<1x16x128xf32, #tpu.memory_space<vmem>>, vector<1x16x128xf32>,
    return
  }
  func.func @transform_0(%arg0: i32) -> (i32, i32, i32) {
    %c0_i32 = arith.constant 0 : i32
    %c0_i32_0 = arith.constant 0 : i32
    %c0_i32_1 = arith.constant 0 : i32
    return %arg0, %c0_i32, %c0_i32_0 : i32, i32, i32
  }
  func.func @transform_1(%arg0: i32) -> (i32, i32) {
    %c0_i32 = arith.constant 0 : i32
    %c0_i32_0 = arith.constant 0 : i32
    %c0_i32_1 = arith.constant 0 : i32
    return %c0_i32, %c0_i32_0 : i32, i32
  }
  func.func @transform_2(%arg0: i32) -> (i32, i32) {
    %c0_i32 = arith.constant 0 : i32
    %c0_i32_0 = arith.constant 0 : i32
    %c0_i32_1 = arith.constant 0 : i32
    return %c0_i32, %c0_i32_0 : i32, i32
  }
  func.func @transform_3(%arg0: i32) -> (i32, i32) {
    %c0_i32 = arith.constant 0 : i32
    %c0_i32_0 = arith.constant 0 : i32
    %c0_i32_1 = arith.constant 0 : i32
    return %c0_i32, %c0_i32_0 : i32, i32
  }
  func.func @transform_4(%arg0: i32) -> (i32, i32) {
    %c0_i32 = arith.constant 0 : i32
    %c0_i32_0 = arith.constant 0 : i32
    %c0_i32_1 = arith.constant 0 : i32
    return %c0_i32, %c0_i32_0 : i32, i32
  }
  func.func @transform_5(%arg0: i32) -> (i32, i32, i32) {
    %c0_i32 = arith.constant 0 : i32
    %c0_i32_0 = arith.constant 0 : i32
    %c0_i32_1 = arith.constant 0 : i32
    return %arg0, %c0_i32, %c0_i32_0 : i32, i32, i32
  }
}

</mosaic_0001>

<llo_original>
// kernel: tpu_custom_call.1
$region0: #{tpu_custom_call.1}
  #allocation0 [shape = 'u32[]', space=smem, size = 0x4, offset = 0x4, fixed_abs, tag = 'smem constant byte address 0x4 - core index']
  #allocation1 [shape = 'u32[144,128]{1,0:T(1,128)}', space=vmem, size = 0x12000, scoped, tag = 'internal scratch']
  %s0 = inlined_call_operand.hbm [shape: bf16[2,16,32], index: 0, kind: input, shape index: {}]
  %s1 = inlined_call_operand.hbm [shape: bf16[32,768], index: 1, kind: input, shape index: {}]
  %s2 = inlined_call_operand.hbm [shape: f32[16,16], index: 2, kind: input, shape index: {}]
  %s3 = inlined_call_operand.hbm [shape: bf16[256,128], index: 3, kind: input, shape index: {}]
  %s4 = inlined_call_operand.vmem [shape: f32[1,128], index: 4, kind: input, shape index: {}]
  %s5 = inlined_call_operand.hbm [shape: f32[2,16,128], index: 5, kind: output, shape index: {}]
  %s6 = sld [smem:[#allocation0]]
  $region69: #{tpu_custom_call.1} parent=0
    _
  %s8 = ssub.s32 1, %s6
  %s9 = scalar_select 0, %s8, %s6
  $region1: #{tpu_custom_call.1} parent=0
    #allocation2 [shape = 'u8[8192]{0}', space=vmem, size = 0x2000, scoped, tag = 'input window, operand 0']
    #allocation3 [shape = 's32[2]{0}', space=sflag, size = 0x8, scoped, tag = 'scoped memory for tpu_custom_call.1']
    #allocation4 [shape = 's32[2]{0}', space=sflag, size = 0x8, scoped, tag = 'scoped memory for tpu_custom_call.1']
    #allocation5 [shape = 'u8[49152]{0}', space=vmem, size = 0xc000, scoped, tag = 'input window, operand 1, single buffered']
    #allocation6 [shape = 's32[1]{0}', space=sflag, size = 0x4, scoped, tag = 'scoped memory for tpu_custom_call.1']
    #allocation7 [shape = 'u8[8192]{0}', space=vmem, size = 0x2000, scoped, tag = 'input window, operand 2, single buffered']
    #allocation8 [shape = 'u8[65536]{0}', space=vmem, size = 0x10000, scoped, tag = 'input window, operand 3, single buffered']
    #allocation9 [shape = 's32[1]{0}', space=sflag, size = 0x4, scoped, tag = 'scoped memory for tpu_custom_call.1']
    #allocation10 [shape = 'u8[16384]{0}', space=vmem, size = 0x4000, scoped, tag = 'output window, operand 0']
    %10 = vsyncpa [#allocation3], 0
    %s11 = scalar_lea.sflag [#allocation3], 1
    %12 = vsyncpa %s11, 0
    %13 = vsyncpa [#allocation6], 0
    %14 = vsyncpa [#allocation9], 0
    %15 = vsyncpa [#allocation4], 0
    %s16 = scalar_lea.sflag [#allocation4], 1
    %17 = vsyncpa %s16, 0
    loop: start=0, step=1, limit=4
    $region2: #{tpu_custom_call.1} parent=1 // loop_pre_header
      _
    $region3: #{tpu_custom_call.1} parent=1 // loop_header
      %s19 = sphi 0, %s23
      %p20 = scmp.ge.s32.totalorder %s19, 4
      %s29 = sphi 0, %s31
      %s32 = sphi 0, %s29
      %s33 = sphi 0, %s32
      %s49 = sphi 0, %s33
      %s53 = sphi 0, %s53
      %s55 = sphi 0, %s53
      %s56 = sphi 0, %s55
      %s70 = sphi 0, %s56
      %s74 = sphi 0, %s74
      %s76 = sphi 0, %s74
      %s77 = sphi 0, %s76
      %s91 = sphi 0, %s77
      %s95 = sphi 0, %s95
      %s97 = sphi 0, %s95
      %s98 = sphi 0, %s97
      %s112 = sphi 0, %s98
      %s116 = sphi 0, %s116
      %s118 = sphi 0, %s116
      %s119 = sphi 0, %s118
      %s133 = sphi 0, %s119
      %s139 = sphi 0, %s141
      %s142 = sphi 0, %s139
      %s143 = sphi 0, %s142
      %s159 = sphi 0, %s143
    $region4: #{tpu_custom_call.1} parent=1 // loop_header_branch
      %22 = sbr.rel (%p20) target = $region8
    $region5: #{tpu_custom_call.1} parent=1 // loop_body
      %s24 = ssub.s32 %s19, 1
      %s25 = ssub.s32 %s19, 2
      %s26 = sadd.s32 %s19, 1
      %s27 = ssub.s32 %s19, %s26
      %p28 = scmp.eq.s32.totalorder %s27, 0
      %s30 = sadd.s32 %s29, 1
      %s31 = scalar_select %p28, %s29, %s30
      %p34 = pneg %p28
      %p35 = scmp.eq.s32.totalorder %s19, 1
      %p36 = por %p34, %p35
      %p37 = scmp.ne.s32.totalorder %s29, %s32
      %p38 = scmp.eq.s32.totalorder %s19, 0
      %p39 = por %p37, %p38
      %p40 = scmp.ne.s32.totalorder %s29, %s32
      %p41 = scmp.eq.s32.totalorder %s24, 1
      %p42 = por %p40, %p41
      %p43 = scmp.ne.s32.totalorder %s32, %s33
      %p44 = scmp.eq.s32.totalorder %s24, 0
      %p45 = por %p43, %p44
      %p46 = scmp.ne.s32.totalorder %s32, %s33
      %p47 = scmp.eq.s32.totalorder %s25, 1
      %p48 = por %p46, %p47
      %p50 = scmp.ne.s32.totalorder %s33, %s49
      %p51 = scmp.eq.s32.totalorder %s25, 0
      %p52 = por %p50, %p51
      %s54 = sadd.s32 %s53, 1
      %p57 = scmp.eq.s32.totalorder %s19, 1
      %p58 = scmp.ne.s32.totalorder %s53, %s55
      %p59 = scmp.eq.s32.totalorder %s19, 0
      %p60 = por %p58, %p59
      %p61 = scmp.ne.s32.totalorder %s53, %s55
      %p62 = scmp.eq.s32.totalorder %s24, 1
      %p63 = por %p61, %p62
      %p64 = scmp.ne.s32.totalorder %s55, %s56
      %p65 = scmp.eq.s32.totalorder %s24, 0
      %p66 = por %p64, %p65
      %p67 = scmp.ne.s32.totalorder %s55, %s56
      %p68 = scmp.eq.s32.totalorder %s25, 1
      %p69 = por %p67, %p68
      %p71 = scmp.ne.s32.totalorder %s56, %s70
      %p72 = scmp.eq.s32.totalorder %s25, 0
      %p73 = por %p71, %p72
      %s75 = sadd.s32 %s74, 1
      %p78 = scmp.eq.s32.totalorder %s19, 1
      %p79 = scmp.ne.s32.totalorder %s74, %s76
      %p80 = scmp.eq.s32.totalorder %s19, 0
      %p81 = por %p79, %p80
      %p82 = scmp.ne.s32.totalorder %s74, %s76
      %p83 = scmp.eq.s32.totalorder %s24, 1
      %p84 = por %p82, %p83
      %p85 = scmp.ne.s32.totalorder %s76, %s77
      %p86 = scmp.eq.s32.totalorder %s24, 0
      %p87 = por %p85, %p86
      %p88 = scmp.ne.s32.totalorder %s76, %s77
      %p89 = scmp.eq.s32.totalorder %s25, 1
      %p90 = por %p88, %p89
      %p92 = scmp.ne.s32.totalorder %s77, %s91
      %p93 = scmp.eq.s32.totalorder %s25, 0
      %p94 = por %p92, %p93
      %s96 = sadd.s32 %s95, 1
      %p99 = scmp.eq.s32.totalorder %s19, 1
      %p100 = scmp.ne.s32.totalorder %s95, %s97
      %p101 = scmp.eq.s32.totalorder %s19, 0
      %p102 = por %p100, %p101
      %p103 = scmp.ne.s32.totalorder %s95, %s97
      %p104 = scmp.eq.s32.totalorder %s24, 1
      %p105 = por %p103, %p104
      %p106 = scmp.ne.s32.totalorder %s97, %s98
      %p107 = scmp.eq.s32.totalorder %s24, 0
      %p108 = por %p106, %p107
      %p109 = scmp.ne.s32.totalorder %s97, %s98
      %p110 = scmp.eq.s32.totalorder %s25, 1
      %p111 = por %p109, %p110
      %p113 = scmp.ne.s32.totalorder %s98, %s112
      %p114 = scmp.eq.s32.totalorder %s25, 0
      %p115 = por %p113, %p114
      %s117 = sadd.s32 %s116, 1
      %p120 = scmp.eq.s32.totalorder %s19, 1
      %p121 = scmp.ne.s32.totalorder %s116, %s118
      %p122 = scmp.eq.s32.totalorder %s19, 0
      %p123 = por %p121, %p122
      %p124 = scmp.ne.s32.totalorder %s116, %s118
      %p125 = scmp.eq.s32.totalorder %s24, 1
      %p126 = por %p124, %p125
      %p127 = scmp.ne.s32.totalorder %s118, %s119
      %p128 = scmp.eq.s32.totalorder %s24, 0
      %p129 = por %p127, %p128
      %p130 = scmp.ne.s32.totalorder %s118, %s119
      %p131 = scmp.eq.s32.totalorder %s25, 1
      %p132 = por %p130, %p131
      %p134 = scmp.ne.s32.totalorder %s119, %s133
      %p135 = scmp.eq.s32.totalorder %s25, 0
      %p136 = por %p134, %p135
      %s137 = ssub.s32 %s19, %s26
      %p138 = scmp.eq.s32.totalorder %s137, 0
      %s140 = sadd.s32 %s139, 1
      %s141 = scalar_select %p138, %s139, %s140
      %p144 = pneg %p138
      %p145 = scmp.eq.s32.totalorder %s19, 1
      %p146 = por %p144, %p145
      %p147 = scmp.ne.s32.totalorder %s139, %s142
      %p148 = scmp.eq.s32.totalorder %s19, 0
      %p149 = por %p147, %p148
      %p150 = scmp.ne.s32.totalorder %s139, %s142
      %p151 = scmp.eq.s32.totalorder %s24, 1
      %p152 = por %p150, %p151
      %p153 = scmp.ne.s32.totalorder %s142, %s143
      %p154 = scmp.eq.s32.totalorder %s24, 0
      %p155 = por %p153, %p154
      %p156 = scmp.ne.s32.totalorder %s142, %s143
      %p157 = scmp.eq.s32.totalorder %s25, 1
      %p158 = por %p156, %p157
      %p160 = scmp.ne.s32.totalorder %s143, %s159
      %p161 = scmp.eq.s32.totalorder %s25, 0
      %p162 = por %p160, %p161
      %p163 = scmp.le.s32.totalorder 1, %s19
      %p164 = scmp.lt.s32.totalorder %s19, 3
      %p165 = pnand %p163, %p164
      %p166 = pneg %p165
      // Predicated region
      $region9: #{tpu_custom_call.1} parent=5 // pred_check
        _
      $region10: #{tpu_custom_call.1} parent=5 // pred_check_branch
        %168 = sbr.rel (%p165) target = $region12
      $region11: #{tpu_custom_call.1} parent=5 // pred_region
        %s169 = ssub.s32 %s19, 1
        // Predicated region
        $region13: #{tpu_custom_call.1} parent=11 // pred_check
          %p170 = pneg %p66
        $region14: #{tpu_custom_call.1} parent=11 // pred_check_branch
          %172 = sbr.rel (%p170) target = $region16
        $region15: #{tpu_custom_call.1} parent=11 // pred_region
          %s174 = ssub.s32 1536, 1536
          %175 = vsyncadd [#allocation6], %s174
          %s176 = sshll.u32 [#allocation5], 4
          %s177 = int_to_ptr.vmem [resolvable:$true] %s176
          %182 = dma.hbm_to_vmem [thread:$0]  %s1, 1536, %s177, [#allocation6], 384, 384, 24
        $region16: #{tpu_custom_call.1} parent=11 // pred_fallthru
          _
        // Predicated region
        $region17: #{tpu_custom_call.1} parent=11 // pred_check
          %p183 = pneg %p87
        $region18: #{tpu_custom_call.1} parent=11 // pred_check_branch
          %185 = sbr.rel (%p183) target = $region20
        $region19: #{tpu_custom_call.1} parent=11 // pred_region
          %s187 = ssub.s32 256, 256
          %188 = vsyncadd [#allocation6], %s187
          %s189 = sshll.u32 [#allocation7], 4
          %s190 = int_to_ptr.vmem [resolvable:$true] %s189
          %195 = dma.hbm_to_vmem [thread:$0]  %s2, 256, %s190, [#allocation6], 128, 128, 8
        $region20: #{tpu_custom_call.1} parent=11 // pred_fallthru
          _
        // Predicated region
        $region21: #{tpu_custom_call.1} parent=11 // pred_check
          %p196 = pneg %p108
        $region22: #{tpu_custom_call.1} parent=11 // pred_check_branch
          %198 = sbr.rel (%p196) target = $region24
        $region23: #{tpu_custom_call.1} parent=11 // pred_region
          %s200 = ssub.s32 2048, 2048
          %201 = vsyncadd [#allocation9], %s200
          %s202 = sshll.u32 [#allocation8], 4
          %s203 = int_to_ptr.vmem [resolvable:$true] %s202
          %208 = dma.hbm_to_vmem [thread:$0]  %s3, 2048, %s203, [#allocation9], 64, 64, 4
        $region24: #{tpu_custom_call.1} parent=11 // pred_fallthru
          _
        // Predicated region
        $region25: #{tpu_custom_call.1} parent=11 // pred_check
          %p209 = pneg %p129
        $region26: #{tpu_custom_call.1} parent=11 // pred_check_branch
          %211 = sbr.rel (%p209) target = $region28
        $region27: #{tpu_custom_call.1} parent=11 // pred_region
          _
        $region28: #{tpu_custom_call.1} parent=11 // pred_fallthru
          _
      $region12: #{tpu_custom_call.1} parent=5 // pred_fallthru
        _
      %p212 = scmp.lt.s32.totalorder %s19, 2
      // Predicated region
      $region29: #{tpu_custom_call.1} parent=5 // pred_check
        %p213 = pneg %p212
      $region30: #{tpu_custom_call.1} parent=5 // pred_check_branch
        %215 = sbr.rel (%p213) target = $region32
      $region31: #{tpu_custom_call.1} parent=5 // pred_region
        // Predicated region
        $region33: #{tpu_custom_call.1} parent=31 // pred_check
          %p216 = pneg %p39
        $region34: #{tpu_custom_call.1} parent=31 // pred_check_branch
          %218 = sbr.rel (%p216) target = $region36
        $region35: #{tpu_custom_call.1} parent=31 // pred_region
          %s219 = sand.u32 %s29, 1
          %s220 = scalar_lea.sflag [#allocation3], %s219
          %s221 = sand.u32 %s29, 1
          %s222 = smul.addr %s221, 8
          %s223 = scalar_lea.vmem [#allocation2], %s222
          %s225 = ssub.s32 128, 128
          %226 = vsyncadd %s220, %s225
          %s227 = smul.addr %s19, 2
          %s228 = smul.addr %s227, 64
          %s229 = scalar_lea.hbm %s0, %s228
          %s230 = sshll.u32 %s223, 4
          %s231 = int_to_ptr.vmem [resolvable:$true] %s230
          %236 = dma.hbm_to_vmem [thread:$0]  %s229, 128, %s231, %s220, 64, 64, 4
        $region36: #{tpu_custom_call.1} parent=31 // pred_fallthru
          _
      $region32: #{tpu_custom_call.1} parent=5 // pred_fallthru
        _
      %p237 = scmp.le.s32.totalorder 1, %s19
      %p238 = scmp.lt.s32.totalorder %s19, 3
      %p239 = pnand %p237, %p238
      %p240 = pneg %p239
      // Predicated region
      $region37: #{tpu_custom_call.1} parent=5 // pred_check
        _
      $region38: #{tpu_custom_call.1} parent=5 // pred_check_branch
        %242 = sbr.rel (%p239) target = $region40
      $region39: #{tpu_custom_call.1} parent=5 // pred_region
        %s243 = ssub.s32 %s19, 1
        %s244 = sand.u32 %s32, 1
        %s245 = scalar_lea.sflag [#allocation3], %s244
        %s246 = sand.u32 %s32, 1
        %s247 = smul.addr %s246, 8
        %s248 = scalar_lea.vmem [#allocation2], %s247
        // Predicated region
        $region41: #{tpu_custom_call.1} parent=39 // pred_check
          %p249 = pneg %p45
        $region42: #{tpu_custom_call.1} parent=39 // pred_check_branch
          %251 = sbr.rel (%p249) target = $region44
        $region43: #{tpu_custom_call.1} parent=39 // pred_region
          %252 = dma.done %s245, 128
        $region44: #{tpu_custom_call.1} parent=39 // pred_fallthru
          _
        // Predicated region
        $region45: #{tpu_custom_call.1} parent=39 // pred_check
          %p253 = pneg %p66
        $region46: #{tpu_custom_call.1} parent=39 // pred_check_branch
          %255 = sbr.rel (%p253) target = $region48
        $region47: #{tpu_custom_call.1} parent=39 // pred_region
          %256 = dma.done [#allocation6], 1536
        $region48: #{tpu_custom_call.1} parent=39 // pred_fallthru
          _
        // Predicated region
        $region49: #{tpu_custom_call.1} parent=39 // pred_check
          %p257 = pneg %p87
        $region50: #{tpu_custom_call.1} parent=39 // pred_check_branch
          %259 = sbr.rel (%p257) target = $region52
        $region51: #{tpu_custom_call.1} parent=39 // pred_region
          %260 = dma.done [#allocation6], 256
        $region52: #{tpu_custom_call.1} parent=39 // pred_fallthru
          _
        // Predicated region
        $region53: #{tpu_custom_call.1} parent=39 // pred_check
          %p261 = pneg %p108
        $region54: #{tpu_custom_call.1} parent=39 // pred_check_branch
          %263 = sbr.rel (%p261) target = $region56
        $region55: #{tpu_custom_call.1} parent=39 // pred_region
          %264 = dma.done [#allocation9], 2048
        $region56: #{tpu_custom_call.1} parent=39 // pred_fallthru
          _
        %s265 = sand.u32 %s32, 1
        %s266 = scalar_lea.sflag [#allocation3], %s265
        %s267 = sand.u32 %s32, 1
        %s268 = smul.addr %s267, 8
        %s269 = scalar_lea.vmem [#allocation2], %s268
        %p270 = pneg %p45
        %p271 = pneg %p42
        %p272 = pneg %p66
        %p273 = pneg %p63
        %p274 = pneg %p87
        %p275 = pneg %p84
        %p276 = pneg %p108
        %p277 = pneg %p105
        %p278 = pneg %p129
        %p279 = pneg %p126
        %p280 = pneg %p155
        %p281 = pneg %p152
        %s282 = sand.u32 %s142, 1
        %s283 = scalar_lea.sflag [#allocation4], %s282
        %s284 = sand.u32 %s142, 1
        %s285 = smul.addr %s284, 16
        %s286 = scalar_lea.vmem [#allocation10], %s285
        %v288 = vld [vmem:[%s248] sm:$0xf]
        %v289 = vld [vmem:[%s248 + $0x4] sm:$0xf]
        %v290 = vld [vmem:[#allocation5] sm:$0xff]
        %v291 = vld [vmem:[#allocation5 + $0x8] sm:$0xff]
        %v292 = vld [vmem:[#allocation5 + $0x10] sm:$0xff]
        %v293 = vld [vmem:[#allocation5 + $0x18] sm:$0xff]
        %v294 = vld [vmem:[#allocation5 + $0x20] sm:$0xff]
        %v295 = vld [vmem:[#allocation5 + $0x28] sm:$0xff]
        %v296 = vld [vmem:[#allocation5 + $0x30] sm:$0xff]
        %v297 = vld [vmem:[#allocation5 + $0x38] sm:$0xff]
        %v298 = vld [vmem:[#allocation5 + $0x40] sm:$0xff]
        %v299 = vld [vmem:[#allocation5 + $0x48] sm:$0xff]
        %v300 = vld [vmem:[#allocation5 + $0x50] sm:$0xff]
        %v301 = vld [vmem:[#allocation5 + $0x58] sm:$0xff]
        %v304 = vunpack.c.l.b16 %v288
        %v305 = vunpack.c.l.b16 %v289
        %v306 = vpack.c.b16 %v305, %v304
        %v319 = vunpack.c.l.b16 %v290
        %v320 = vunpack.c.h.b16 %v290
        %v321 = vunpack.c.l.b16 %v291
        %v322 = vunpack.c.h.b16 %v291
        %v323 = vunpack.c.l.b16 %v292
        %v324 = vunpack.c.h.b16 %v292
        %v325 = vunpack.c.l.b16 %v293
        %v326 = vunpack.c.h.b16 %v293
        %v327 = vunpack.c.l.b16 %v294
        %v328 = vunpack.c.h.b16 %v294
        %v329 = vunpack.c.l.b16 %v295
        %v330 = vunpack.c.h.b16 %v295
        %v331 = vunpack.c.l.b16 %v296
        %v332 = vunpack.c.h.b16 %v296
        %v333 = vunpack.c.l.b16 %v297
        %v334 = vunpack.c.h.b16 %v297
        %v335 = vunpack.c.l.b16 %v298
        %v336 = vunpack.c.h.b16 %v298
        %v337 = vunpack.c.l.b16 %v299
        %v338 = vunpack.c.h.b16 %v299
        %v339 = vunpack.c.l.b16 %v300
        %v340 = vunpack.c.h.b16 %v300
        %v341 = vunpack.c.l.b16 %v301
        %v342 = vunpack.c.h.b16 %v301
        %v343 = vpack.c.b16 %v325, %v319
        %v344 = vpack.c.b16 %v326, %v320
        %v345 = vpack.c.b16 %v327, %v321
        %v346 = vpack.c.b16 %v328, %v322
        %v347 = vpack.c.b16 %v329, %v323
        %v348 = vpack.c.b16 %v330, %v324
        %v349 = vpack.c.b16 %v337, %v331
        %v350 = vpack.c.b16 %v338, %v332
        %v351 = vpack.c.b16 %v339, %v333
        %v352 = vpack.c.b16 %v340, %v334
        %v353 = vpack.c.b16 %v341, %v335
        %v354 = vpack.c.b16 %v342, %v336
        %vm367 = vcmask 261120
        %v369 = vsel %vm367, %v306, 0
        %371 = vmatprep.subr.bf16.mxu0 %v344
        %372 = vmatpush1.bf16.msra.mxu0 %v343
        %373 = vmatprep.subr.bf16.mxu0 %v350
        %374 = vmatpush1.bf16.msra.mxu0 %v349
        %375 = vmatprep.subr.bf16.mxu0 0
        %376 = vmatpush1.bf16.msra.mxu0 0
        %377 = vmatprep.subr.bf16.mxu0 0
        %378 = vmatpush1.bf16.msra.mxu0 0
        %379 = vmatprep.subr.bf16.mxu0 0
        %380 = vmatpush1.bf16.msra.mxu0 0
        %381 = vmatprep.subr.bf16.mxu0 0
        %382 = vmatpush1.bf16.msra.mxu0 0
        %383 = vmatprep.subr.bf16.mxu0 0
        %384 = vmatpush1.bf16.msra.mxu0 0
        %385 = vmatprep.subr.bf16.mxu0 0
        %386 = vmatpush1.bf16.msra.mxu0 0
        %387 = vmatprep.subr.bf16.mxu0 0
        %388 = vmatpush1.bf16.msra.mxu0 0
        %389 = vmatprep.subr.bf16.mxu0 0
        %390 = vmatpush1.bf16.msra.mxu0 0
        %391 = vmatprep.subr.bf16.mxu0 0
        %392 = vmatpush1.bf16.msra.mxu0 0
        %393 = vmatprep.subr.bf16.mxu0 0
        %394 = vmatpush1.bf16.msra.mxu0 0
        %395 = vmatprep.subr.bf16.mxu0 0
        %396 = vmatpush1.bf16.msra.mxu0 0
        %397 = vmatprep.subr.bf16.mxu0 0
        %398 = vmatpush1.bf16.msra.mxu0 0
        %399 = vmatprep.subr.bf16.mxu0 0
        %400 = vmatpush1.bf16.msra.mxu0 0
        %401 = vmatprep.subr.bf16.mxu0 0
        %402 = vmatpush1.bf16.msra.mxu0 0
        %403 = vmatprep.mubr.bf16.mxu0 0
        %404 = vmatmul.mubr.bf16.gmra.mrb[0].mxu0 %v369
        %v405 = vpop.f32.mrb[0].mxu0
        %v406 = vadd.f32 0.0, %v405
        %v407 = vpop.f32.mrb[0].mxu0
        %v408 = vadd.f32 0.0, %v407
        %v409 = vpop.f32.mrb[0].mxu0
        %v410 = vadd.f32 0.0, %v409
        %v411 = vpop.f32.mrb[0].mxu0
        %v412 = vadd.f32 0.0, %v411
        %413 = vdwg.mxu0
        %414 = vmatprep.subr.bf16.mxu0 %v346
        %415 = vmatpush1.bf16.msra.mxu0 %v345
        %416 = vmatprep.subr.bf16.mxu0 %v352
        %417 = vmatpush1.bf16.msra.mxu0 %v351
        %418 = vmatprep.subr.bf16.mxu0 0
        %419 = vmatpush1.bf16.msra.mxu0 0
        %420 = vmatprep.subr.bf16.mxu0 0
        %421 = vmatpush1.bf16.msra.mxu0 0
        %422 = vmatprep.subr.bf16.mxu0 0
        %423 = vmatpush1.bf16.msra.mxu0 0
        %424 = vmatprep.subr.bf16.mxu0 0
        %425 = vmatpush1.bf16.msra.mxu0 0
        %426 = vmatprep.subr.bf16.mxu0 0
        %427 = vmatpush1.bf16.msra.mxu0 0
        %428 = vmatprep.subr.bf16.mxu0 0
        %429 = vmatpush1.bf16.msra.mxu0 0
        %430 = vmatprep.subr.bf16.mxu0 0
        %431 = vmatpush1.bf16.msra.mxu0 0
        %432 = vmatprep.subr.bf16.mxu0 0
        %433 = vmatpush1.bf16.msra.mxu0 0
        %434 = vmatprep.subr.bf16.mxu0 0
        %435 = vmatpush1.bf16.msra.mxu0 0
        %436 = vmatprep.subr.bf16.mxu0 0
        %437 = vmatpush1.bf16.msra.mxu0 0
        %438 = vmatprep.subr.bf16.mxu0 0
        %439 = vmatpush1.bf16.msra.mxu0 0
        %440 = vmatprep.subr.bf16.mxu0 0
        %441 = vmatpush1.bf16.msra.mxu0 0
        %442 = vmatprep.subr.bf16.mxu0 0
        %443 = vmatpush1.bf16.msra.mxu0 0
        %444 = vmatprep.subr.bf16.mxu0 0
        %445 = vmatpush1.bf16.msra.mxu0 0
        %446 = vmatprep.mubr.bf16.mxu0 0
        %447 = vmatmul.mubr.bf16.gmra.mrb[0].mxu0 %v369
        %v448 = vpop.f32.mrb[0].mxu0
        %v449 = vadd.f32 0.0, %v448
        %v450 = vpop.f32.mrb[0].mxu0
        %v451 = vadd.f32 0.0, %v450
        %v452 = vpop.f32.mrb[0].mxu0
        %v453 = vadd.f32 0.0, %v452
        %v454 = vpop.f32.mrb[0].mxu0
        %v455 = vadd.f32 0.0, %v454
        %456 = vdwg.mxu0
        %457 = vmatprep.subr.bf16.mxu0 %v348
        %458 = vmatpush1.bf16.msra.mxu0 %v347
        %459 = vmatprep.subr.bf16.mxu0 %v354
        %460 = vmatpush1.bf16.msra.mxu0 %v353
        %461 = vmatprep.subr.bf16.mxu0 0
        %462 = vmatpush1.bf16.msra.mxu0 0
        %463 = vmatprep.subr.bf16.mxu0 0
        %464 = vmatpush1.bf16.msra.mxu0 0
        %465 = vmatprep.subr.bf16.mxu0 0
        %466 = vmatpush1.bf16.msra.mxu0 0
        %467 = vmatprep.subr.bf16.mxu0 0
        %468 = vmatpush1.bf16.msra.mxu0 0
        %469 = vmatprep.subr.bf16.mxu0 0
        %470 = vmatpush1.bf16.msra.mxu0 0
        %471 = vmatprep.subr.bf16.mxu0 0
        %472 = vmatpush1.bf16.msra.mxu0 0
        %473 = vmatprep.subr.bf16.mxu0 0
        %474 = vmatpush1.bf16.msra.mxu0 0
        %475 = vmatprep.subr.bf16.mxu0 0
        %476 = vmatpush1.bf16.msra.mxu0 0
        %477 = vmatprep.subr.bf16.mxu0 0
        %478 = vmatpush1.bf16.msra.mxu0 0
        %479 = vmatprep.subr.bf16.mxu0 0
        %480 = vmatpush1.bf16.msra.mxu0 0
        %481 = vmatprep.subr.bf16.mxu0 0
        %482 = vmatpush1.bf16.msra.mxu0 0
        %483 = vmatprep.subr.bf16.mxu0 0
        %484 = vmatpush1.bf16.msra.mxu0 0
        %485 = vmatprep.subr.bf16.mxu0 0
        %486 = vmatpush1.bf16.msra.mxu0 0
        %487 = vmatprep.subr.bf16.mxu0 0
        %488 = vmatpush1.bf16.msra.mxu0 0
        %489 = vmatprep.mubr.bf16.mxu0 0
        %490 = vmatmul.mubr.bf16.gmra.mrb[0].mxu0 %v369
        %v491 = vpop.f32.mrb[0].mxu0
        %v492 = vadd.f32 0.0, %v491
        %v493 = vpop.f32.mrb[0].mxu0
        %v494 = vadd.f32 0.0, %v493
        %v495 = vpop.f32.mrb[0].mxu0
        %v496 = vadd.f32 0.0, %v495
        %v497 = vpop.f32.mrb[0].mxu0
        %v498 = vadd.f32 0.0, %v497
        %499 = vdwg.mxu0
        %v500 = vld [vmem:[#allocation7] sm:$0xff]
        %v501 = vld [vmem:[#allocation7 + $0x8] sm:$0xff]
        %v502 = vpack.c.bf16 %v410, %v406
        %v503 = vpack.c.bf16 %v453, %v449
        %v504 = vpack.c.bf16 %v496, %v492
        %v506 = vsel %vm367, %v502, 0
        %v509 = vsel %vm367, %v503, 0
        %511 = vmatprep.subr.bf16.mxu0 0
        %512 = vmatpush1.bf16.xpose.msra.mxu0 %v509
        %513 = vmatprep.subr.bf16.mxu0 0
        %514 = vmatpush1.bf16.xpose.msra.mxu0 0
        %515 = vmatprep.subr.bf16.mxu0 0
        %516 = vmatpush1.bf16.xpose.msra.mxu0 0
        %517 = vmatprep.subr.bf16.mxu0 0
        %518 = vmatpush1.bf16.xpose.msra.mxu0 0
        %519 = vmatprep.subr.bf16.mxu0 0
        %520 = vmatpush1.bf16.xpose.msra.mxu0 0
        %521 = vmatprep.subr.bf16.mxu0 0
        %522 = vmatpush1.bf16.xpose.msra.mxu0 0
        %523 = vmatprep.subr.bf16.mxu0 0
        %524 = vmatpush1.bf16.xpose.msra.mxu0 0
        %525 = vmatprep.subr.bf16.mxu0 0
        %526 = vmatpush1.bf16.xpose.msra.mxu0 0
        %527 = vmatprep.subr.bf16.mxu0 0
        %528 = vmatpush1.bf16.xpose.msra.mxu0 0
        %529 = vmatprep.subr.bf16.mxu0 0
        %530 = vmatpush1.bf16.xpose.msra.mxu0 0
        %531 = vmatprep.subr.bf16.mxu0 0
        %532 = vmatpush1.bf16.xpose.msra.mxu0 0
        %533 = vmatprep.subr.bf16.mxu0 0
        %534 = vmatpush1.bf16.xpose.msra.mxu0 0
        %535 = vmatprep.subr.bf16.mxu0 0
        %536 = vmatpush1.bf16.xpose.msra.mxu0 0
        %537 = vmatprep.subr.bf16.mxu0 0
        %538 = vmatpush1.bf16.xpose.msra.mxu0 0
        %539 = vmatprep.subr.bf16.mxu0 0
        %540 = vmatpush1.bf16.xpose.msra.mxu0 0
        %541 = vmatprep.subr.bf16.mxu0 0
        %542 = vmatpush1.bf16.xpose.msra.mxu0 0
        %543 = vmatprep.mubr.bf16.mxu0 0
        %544 = vmatmul.mubr.bf16.gmra.mrb[0].mxu0 %v506
        %v545 = vpop.f32.mrb[0].mxu0
        %v546 = vadd.f32 %v500, %v545
        %v547 = vpop.f32.mrb[0].mxu0
        %v548 = vpop.f32.mrb[0].mxu0
        %v549 = vadd.f32 %v501, %v548
        %v550 = vpop.f32.mrb[0].mxu0
        %551 = vdwg.mxu0
        %vm552 = vcmask 130048
        %v553 = vsel %vm552, %v546, -inf
        %554 = vmax.xlane.f32.xlu0 %v553
        %v555 = vpop.xlane.xlu0 %554
        %v556 = vsel %vm552, %v549, -inf
        %557 = vmax.xlane.f32.xlu0 %v556
        %v558 = vpop.xlane.xlu0 %557
        %v559 = vsub.f32 %v546, %v555
        %v560 = vsub.f32 %v549, %v558
        %v561 = vmul.f32 %v559, 1.442695
        %v562 = vpow.pop %v561
        %v563 = vmul.f32 %v560, 1.442695
        %v564 = vpow.pop %v563
        %v565 = vsel %vm552, %v562, 0.0
        %566 = vadd.xlane.f32.xlu0 %v565
        %v567 = vpop.xlane.xlu0 %566
        %v568 = vsel %vm552, %v564, 0.0
        %569 = vadd.xlane.f32.xlu0 %v568
        %v570 = vpop.xlane.xlu0 %569
        %v571 = vrcp.pop %v567
        %v572 = vrcp.pop %v570
        %v573 = vmul.f32 %v562, %v571
        %v574 = vmul.f32 %v564, %v572
        %v575 = vpack.c.bf16 %v574, %v573
        %v577 = vsel %vm552, %v575, 0
        %579 = vmatprep.subr.bf16.mxu0 0
        %580 = vmatpush1.bf16.msra.mxu0 %v504
        %581 = vmatprep.subr.bf16.mxu0 0
        %582 = vmatpush1.bf16.msra.mxu0 0
        %583 = vmatprep.subr.bf16.mxu0 0
        %584 = vmatpush1.bf16.msra.mxu0 0
        %585 = vmatprep.subr.bf16.mxu0 0
        %586 = vmatpush1.bf16.msra.mxu0 0
        %587 = vmatprep.subr.bf16.mxu0 0
        %588 = vmatpush1.bf16.msra.mxu0 0
        %589 = vmatprep.subr.bf16.mxu0 0
        %590 = vmatpush1.bf16.msra.mxu0 0
        %591 = vmatprep.subr.bf16.mxu0 0
        %592 = vmatpush1.bf16.msra.mxu0 0
        %593 = vmatprep.subr.bf16.mxu0 0
        %594 = vmatpush1.bf16.msra.mxu0 0
        %595 = vmatprep.subr.bf16.mxu0 0
        %596 = vmatpush1.bf16.msra.mxu0 0
        %597 = vmatprep.subr.bf16.mxu0 0
        %598 = vmatpush1.bf16.msra.mxu0 0
        %599 = vmatprep.subr.bf16.mxu0 0
        %600 = vmatpush1.bf16.msra.mxu0 0
        %601 = vmatprep.subr.bf16.mxu0 0
        %602 = vmatpush1.bf16.msra.mxu0 0
        %603 = vmatprep.subr.bf16.mxu0 0
        %604 = vmatpush1.bf16.msra.mxu0 0
        %605 = vmatprep.subr.bf16.mxu0 0
        %606 = vmatpush1.bf16.msra.mxu0 0
        %607 = vmatprep.subr.bf16.mxu0 0
        %608 = vmatpush1.bf16.msra.mxu0 0
        %609 = vmatprep.subr.bf16.mxu0 0
        %610 = vmatpush1.bf16.msra.mxu0 0
        %611 = vmatprep.mubr.bf16.mxu0 0
        %612 = vmatmul.mubr.bf16.gmra.mrb[0].mxu0 %v577
        %v613 = vpop.f32.mrb[0].mxu0
        %v614 = vadd.f32 0.0, %v613
        %v615 = vpop.f32.mrb[0].mxu0
        %v616 = vpop.f32.mrb[0].mxu0
        %v617 = vadd.f32 0.0, %v616
        %v618 = vpop.f32.mrb[0].mxu0
        %619 = vdwg.mxu0
        %621 = vrot.lane.b32.xlu0 %v502, 96
        %v622 = vpop.permute.xlu0 %621
        %624 = vrot.lane.b32.xlu0 %v503, 96
        %v625 = vpop.permute.xlu0 %624
        %v627 = vsel %vm367, %v622, 0
        %v630 = vsel %vm367, %v625, 0
        %632 = vmatprep.subr.bf16.mxu0 0
        %633 = vmatpush1.bf16.xpose.msra.mxu0 %v630
        %634 = vmatprep.subr.bf16.mxu0 0
        %635 = vmatpush1.bf16.xpose.msra.mxu0 0
        %636 = vmatprep.subr.bf16.mxu0 0
        %637 = vmatpush1.bf16.xpose.msra.mxu0 0
        %638 = vmatprep.subr.bf16.mxu0 0
        %639 = vmatpush1.bf16.xpose.msra.mxu0 0
        %640 = vmatprep.subr.bf16.mxu0 0
        %641 = vmatpush1.bf16.xpose.msra.mxu0 0
        %642 = vmatprep.subr.bf16.mxu0 0
        %643 = vmatpush1.bf16.xpose.msra.mxu0 0
        %644 = vmatprep.subr.bf16.mxu0 0
        %645 = vmatpush1.bf16.xpose.msra.mxu0 0
        %646 = vmatprep.subr.bf16.mxu0 0
        %647 = vmatpush1.bf16.xpose.msra.mxu0 0
        %648 = vmatprep.subr.bf16.mxu0 0
        %649 = vmatpush1.bf16.xpose.msra.mxu0 0
        %650 = vmatprep.subr.bf16.mxu0 0
        %651 = vmatpush1.bf16.xpose.msra.mxu0 0
        %652 = vmatprep.subr.bf16.mxu0 0
        %653 = vmatpush1.bf16.xpose.msra.mxu0 0
        %654 = vmatprep.subr.bf16.mxu0 0
        %655 = vmatpush1.bf16.xpose.msra.mxu0 0
        %656 = vmatprep.subr.bf16.mxu0 0
        %657 = vmatpush1.bf16.xpose.msra.mxu0 0
        %658 = vmatprep.subr.bf16.mxu0 0
        %659 = vmatpush1.bf16.xpose.msra.mxu0 0
        %660 = vmatprep.subr.bf16.mxu0 0
        %661 = vmatpush1.bf16.xpose.msra.mxu0 0
        %662 = vmatprep.subr.bf16.mxu0 0
        %663 = vmatpush1.bf16.xpose.msra.mxu0 0
        %664 = vmatprep.mubr.bf16.mxu0 0
        %665 = vmatmul.mubr.bf16.gmra.mrb[0].mxu0 %v627
        %v666 = vpop.f32.mrb[0].mxu0
        %v667 = vadd.f32 %v500, %v666
        %v668 = vpop.f32.mrb[0].mxu0
        %v669 = vpop.f32.mrb[0].mxu0
        %v670 = vadd.f32 %v501, %v669
        %v671 = vpop.f32.mrb[0].mxu0
        %672 = vdwg.mxu0
        %v673 = vsel %vm552, %v667, -inf
        %674 = vmax.xlane.f32.xlu0 %v673
        %v675 = vpop.xlane.xlu0 %674
        %v676 = vsel %vm552, %v670, -inf
        %677 = vmax.xlane.f32.xlu0 %v676
        %v678 = vpop.xlane.xlu0 %677
        %v679 = vsub.f32 %v667, %v675
        %v680 = vsub.f32 %v670, %v678
        %v681 = vmul.f32 %v679, 1.442695
        %v682 = vpow.pop %v681
        %v683 = vmul.f32 %v680, 1.442695
        %v684 = vpow.pop %v683
        %v685 = vsel %vm552, %v682, 0.0
        %686 = vadd.xlane.f32.xlu0 %v685
        %v687 = vpop.xlane.xlu0 %686
        %v688 = vsel %vm552, %v684, 0.0
        %689 = vadd.xlane.f32.xlu0 %v688
        %v690 = vpop.xlane.xlu0 %689
        %v691 = vrcp.pop %v687
        %v692 = vrcp.pop %v690
        %v693 = vmul.f32 %v682, %v691
        %v694 = vmul.f32 %v684, %v692
        %v695 = vpack.c.bf16 %v694, %v693
        %697 = vrot.lane.b32.xlu0 %v504, 96
        %v698 = vpop.permute.xlu0 %697
        %v701 = vsel %vm552, %v695, 0
        %703 = vmatprep.subr.bf16.mxu0 0
        %704 = vmatpush1.bf16.msra.mxu0 %v698
        %705 = vmatprep.subr.bf16.mxu0 0
        %706 = vmatpush1.bf16.msra.mxu0 0
        %707 = vmatprep.subr.bf16.mxu0 0
        %708 = vmatpush1.bf16.msra.mxu0 0
        %709 = vmatprep.subr.bf16.mxu0 0
        %710 = vmatpush1.bf16.msra.mxu0 0
        %711 = vmatprep.subr.bf16.mxu0 0
        %712 = vmatpush1.bf16.msra.mxu0 0
        %713 = vmatprep.subr.bf16.mxu0 0
        %714 = vmatpush1.bf16.msra.mxu0 0
        %715 = vmatprep.subr.bf16.mxu0 0
        %716 = vmatpush1.bf16.msra.mxu0 0
        %717 = vmatprep.subr.bf16.mxu0 0
        %718 = vmatpush1.bf16.msra.mxu0 0
        %719 = vmatprep.subr.bf16.mxu0 0
        %720 = vmatpush1.bf16.msra.mxu0 0
        %721 = vmatprep.subr.bf16.mxu0 0
        %722 = vmatpush1.bf16.msra.mxu0 0
        %723 = vmatprep.subr.bf16.mxu0 0
        %724 = vmatpush1.bf16.msra.mxu0 0
        %725 = vmatprep.subr.bf16.mxu0 0
        %726 = vmatpush1.bf16.msra.mxu0 0
        %727 = vmatprep.subr.bf16.mxu0 0
        %728 = vmatpush1.bf16.msra.mxu0 0
        %729 = vmatprep.subr.bf16.mxu0 0
        %730 = vmatpush1.bf16.msra.mxu0 0
        %731 = vmatprep.subr.bf16.mxu0 0
        %732 = vmatpush1.bf16.msra.mxu0 0
        %733 = vmatprep.subr.bf16.mxu0 0
        %734 = vmatpush1.bf16.msra.mxu0 0
        %735 = vmatprep.mubr.bf16.mxu0 0
        %736 = vmatmul.mubr.bf16.gmra.mrb[0].mxu0 %v701
        %v737 = vpop.f32.mrb[0].mxu0
        %v738 = vadd.f32 0.0, %v737
        %v739 = vpop.f32.mrb[0].mxu0
        %v740 = vpop.f32.mrb[0].mxu0
        %v741 = vadd.f32 0.0, %v740
        %v742 = vpop.f32.mrb[0].mxu0
        %743 = vdwg.mxu0
        %744 = vrot.lane.b32.xlu0 %v502, 64
        %v745 = vpop.permute.xlu0 %744
        %746 = vrot.lane.b32.xlu0 %v503, 64
        %v747 = vpop.permute.xlu0 %746
        %v749 = vsel %vm367, %v745, 0
        %v752 = vsel %vm367, %v747, 0
        %754 = vmatprep.subr.bf16.mxu0 0
        %755 = vmatpush1.bf16.xpose.msra.mxu0 %v752
        %756 = vmatprep.subr.bf16.mxu0 0
        %757 = vmatpush1.bf16.xpose.msra.mxu0 0
        %758 = vmatprep.subr.bf16.mxu0 0
        %759 = vmatpush1.bf16.xpose.msra.mxu0 0
        %760 = vmatprep.subr.bf16.mxu0 0
        %761 = vmatpush1.bf16.xpose.msra.mxu0 0
        %762 = vmatprep.subr.bf16.mxu0 0
        %763 = vmatpush1.bf16.xpose.msra.mxu0 0
        %764 = vmatprep.subr.bf16.mxu0 0
        %765 = vmatpush1.bf16.xpose.msra.mxu0 0
        %766 = vmatprep.subr.bf16.mxu0 0
        %767 = vmatpush1.bf16.xpose.msra.mxu0 0
        %768 = vmatprep.subr.bf16.mxu0 0
        %769 = vmatpush1.bf16.xpose.msra.mxu0 0
        %770 = vmatprep.subr.bf16.mxu0 0
        %771 = vmatpush1.bf16.xpose.msra.mxu0 0
        %772 = vmatprep.subr.bf16.mxu0 0
        %773 = vmatpush1.bf16.xpose.msra.mxu0 0
        %774 = vmatprep.subr.bf16.mxu0 0
        %775 = vmatpush1.bf16.xpose.msra.mxu0 0
        %776 = vmatprep.subr.bf16.mxu0 0
        %777 = vmatpush1.bf16.xpose.msra.mxu0 0
        %778 = vmatprep.subr.bf16.mxu0 0
        %779 = vmatpush1.bf16.xpose.msra.mxu0 0
        %780 = vmatprep.subr.bf16.mxu0 0
        %781 = vmatpush1.bf16.xpose.msra.mxu0 0
        %782 = vmatprep.subr.bf16.mxu0 0
        %783 = vmatpush1.bf16.xpose.msra.mxu0 0
        %784 = vmatprep.subr.bf16.mxu0 0
        %785 = vmatpush1.bf16.xpose.msra.mxu0 0
        %786 = vmatprep.mubr.bf16.mxu0 0
        %787 = vmatmul.mubr.bf16.gmra.mrb[0].mxu0 %v749
        %v788 = vpop.f32.mrb[0].mxu0
        %v789 = vadd.f32 %v500, %v788
        %v790 = vpop.f32.mrb[0].mxu0
        %v791 = vpop.f32.mrb[0].mxu0
        %v792 = vadd.f32 %v501, %v791
        %v793 = vpop.f32.mrb[0].mxu0
        %794 = vdwg.mxu0
        %v795 = vsel %vm552, %v789, -inf
        %796 = vmax.xlane.f32.xlu0 %v795
        %v797 = vpop.xlane.xlu0 %796
        %v798 = vsel %vm552, %v792, -inf
        %799 = vmax.xlane.f32.xlu0 %v798
        %v800 = vpop.xlane.xlu0 %799
        %v801 = vsub.f32 %v789, %v797
        %v802 = vsub.f32 %v792, %v800
        %v803 = vmul.f32 %v801, 1.442695
        %v804 = vpow.pop %v803
        %v805 = vmul.f32 %v802, 1.442695
        %v806 = vpow.pop %v805
        %v807 = vsel %vm552, %v804, 0.0
        %808 = vadd.xlane.f32.xlu0 %v807
        %v809 = vpop.xlane.xlu0 %808
        %v810 = vsel %vm552, %v806, 0.0
        %811 = vadd.xlane.f32.xlu0 %v810
        %v812 = vpop.xlane.xlu0 %811
        %v813 = vrcp.pop %v809
        %v814 = vrcp.pop %v812
        %v815 = vmul.f32 %v804, %v813
        %v816 = vmul.f32 %v806, %v814
        %v817 = vpack.c.bf16 %v816, %v815
        %818 = vrot.lane.b32.xlu0 %v504, 64
        %v819 = vpop.permute.xlu0 %818
        %v822 = vsel %vm552, %v817, 0
        %824 = vmatprep.subr.bf16.mxu0 0
        %825 = vmatpush1.bf16.msra.mxu0 %v819
        %826 = vmatprep.subr.bf16.mxu0 0
        %827 = vmatpush1.bf16.msra.mxu0 0
        %828 = vmatprep.subr.bf16.mxu0 0
        %829 = vmatpush1.bf16.msra.mxu0 0
        %830 = vmatprep.subr.bf16.mxu0 0
        %831 = vmatpush1.bf16.msra.mxu0 0
        %832 = vmatprep.subr.bf16.mxu0 0
        %833 = vmatpush1.bf16.msra.mxu0 0
        %834 = vmatprep.subr.bf16.mxu0 0
        %835 = vmatpush1.bf16.msra.mxu0 0
        %836 = vmatprep.subr.bf16.mxu0 0
        %837 = vmatpush1.bf16.msra.mxu0 0
        %838 = vmatprep.subr.bf16.mxu0 0
        %839 = vmatpush1.bf16.msra.mxu0 0
        %840 = vmatprep.subr.bf16.mxu0 0
        %841 = vmatpush1.bf16.msra.mxu0 0
        %842 = vmatprep.subr.bf16.mxu0 0
        %843 = vmatpush1.bf16.msra.mxu0 0
        %844 = vmatprep.subr.bf16.mxu0 0
        %845 = vmatpush1.bf16.msra.mxu0 0
        %846 = vmatprep.subr.bf16.mxu0 0
        %847 = vmatpush1.bf16.msra.mxu0 0
        %848 = vmatprep.subr.bf16.mxu0 0
        %849 = vmatpush1.bf16.msra.mxu0 0
        %850 = vmatprep.subr.bf16.mxu0 0
        %851 = vmatpush1.bf16.msra.mxu0 0
        %852 = vmatprep.subr.bf16.mxu0 0
        %853 = vmatpush1.bf16.msra.mxu0 0
        %854 = vmatprep.subr.bf16.mxu0 0
        %855 = vmatpush1.bf16.msra.mxu0 0
        %856 = vmatprep.mubr.bf16.mxu0 0
        %857 = vmatmul.mubr.bf16.gmra.mrb[0].mxu0 %v822
        %v858 = vpop.f32.mrb[0].mxu0
        %v859 = vadd.f32 0.0, %v858
        %v860 = vpop.f32.mrb[0].mxu0
        %v861 = vpop.f32.mrb[0].mxu0
        %v862 = vadd.f32 0.0, %v861
        %v863 = vpop.f32.mrb[0].mxu0
        %864 = vdwg.mxu0
        %865 = vrot.lane.b32.xlu0 %v502, 32
        %v866 = vpop.permute.xlu0 %865
        %867 = vrot.lane.b32.xlu0 %v503, 32
        %v868 = vpop.permute.xlu0 %867
        %v870 = vsel %vm367, %v866, 0
        %v873 = vsel %vm367, %v868, 0
        %875 = vmatprep.subr.bf16.mxu0 0
        %876 = vmatpush1.bf16.xpose.msra.mxu0 %v873
        %877 = vmatprep.subr.bf16.mxu0 0
        %878 = vmatpush1.bf16.xpose.msra.mxu0 0
        %879 = vmatprep.subr.bf16.mxu0 0
        %880 = vmatpush1.bf16.xpose.msra.mxu0 0
        %881 = vmatprep.subr.bf16.mxu0 0
        %882 = vmatpush1.bf16.xpose.msra.mxu0 0
        %883 = vmatprep.subr.bf16.mxu0 0
        %884 = vmatpush1.bf16.xpose.msra.mxu0 0
        %885 = vmatprep.subr.bf16.mxu0 0
        %886 = vmatpush1.bf16.xpose.msra.mxu0 0
        %887 = vmatprep.subr.bf16.mxu0 0
        %888 = vmatpush1.bf16.xpose.msra.mxu0 0
        %889 = vmatprep.subr.bf16.mxu0 0
        %890 = vmatpush1.bf16.xpose.msra.mxu0 0
        %891 = vmatprep.subr.bf16.mxu0 0
        %892 = vmatpush1.bf16.xpose.msra.mxu0 0
        %893 = vmatprep.subr.bf16.mxu0 0
        %894 = vmatpush1.bf16.xpose.msra.mxu0 0
        %895 = vmatprep.subr.bf16.mxu0 0
        %896 = vmatpush1.bf16.xpose.msra.mxu0 0
        %897 = vmatprep.subr.bf16.mxu0 0
        %898 = vmatpush1.bf16.xpose.msra.mxu0 0
        %899 = vmatprep.subr.bf16.mxu0 0
        %900 = vmatpush1.bf16.xpose.msra.mxu0 0
        %901 = vmatprep.subr.bf16.mxu0 0
        %902 = vmatpush1.bf16.xpose.msra.mxu0 0
        %903 = vmatprep.subr.bf16.mxu0 0
        %904 = vmatpush1.bf16.xpose.msra.mxu0 0
        %905 = vmatprep.subr.bf16.mxu0 0
        %906 = vmatpush1.bf16.xpose.msra.mxu0 0
        %907 = vmatprep.mubr.bf16.mxu0 0
        %908 = vmatmul.mubr.bf16.gmra.mrb[0].mxu0 %v870
        %v909 = vpop.f32.mrb[0].mxu0
        %v910 = vadd.f32 %v500, %v909
        %v911 = vpop.f32.mrb[0].mxu0
        %v912 = vpop.f32.mrb[0].mxu0
        %v913 = vadd.f32 %v501, %v912
        %v914 = vpop.f32.mrb[0].mxu0
        %915 = vdwg.mxu0
        %v916 = vsel %vm552, %v910, -inf
        %917 = vmax.xlane.f32.xlu0 %v916
        %v918 = vpop.xlane.xlu0 %917
        %v919 = vsel %vm552, %v913, -inf
        %920 = vmax.xlane.f32.xlu0 %v919
        %v921 = vpop.xlane.xlu0 %920
        %v922 = vsub.f32 %v910, %v918
        %v923 = vsub.f32 %v913, %v921
        %v924 = vmul.f32 %v922, 1.442695
        %v925 = vpow.pop %v924
        %v926 = vmul.f32 %v923, 1.442695
        %v927 = vpow.pop %v926
        %v928 = vsel %vm552, %v925, 0.0
        %929 = vadd.xlane.f32.xlu0 %v928
        %v930 = vpop.xlane.xlu0 %929
        %v931 = vsel %vm552, %v927, 0.0
        %932 = vadd.xlane.f32.xlu0 %v931
        %v933 = vpop.xlane.xlu0 %932
        %v934 = vrcp.pop %v930
        %v935 = vrcp.pop %v933
        %v936 = vmul.f32 %v925, %v934
        %v937 = vmul.f32 %v927, %v935
        %v938 = vpack.c.bf16 %v937, %v936
        %939 = vrot.lane.b32.xlu0 %v504, 32
        %v940 = vpop.permute.xlu0 %939
        %v943 = vsel %vm552, %v938, 0
        %945 = vmatprep.subr.bf16.mxu0 0
        %946 = vmatpush1.bf16.msra.mxu0 %v940
        %947 = vmatprep.subr.bf16.mxu0 0
        %948 = vmatpush1.bf16.msra.mxu0 0
        %949 = vmatprep.subr.bf16.mxu0 0
        %950 = vmatpush1.bf16.msra.mxu0 0
        %951 = vmatprep.subr.bf16.mxu0 0
        %952 = vmatpush1.bf16.msra.mxu0 0
        %953 = vmatprep.subr.bf16.mxu0 0
        %954 = vmatpush1.bf16.msra.mxu0 0
        %955 = vmatprep.subr.bf16.mxu0 0
        %956 = vmatpush1.bf16.msra.mxu0 0
        %957 = vmatprep.subr.bf16.mxu0 0
        %958 = vmatpush1.bf16.msra.mxu0 0
        %959 = vmatprep.subr.bf16.mxu0 0
        %960 = vmatpush1.bf16.msra.mxu0 0
        %961 = vmatprep.subr.bf16.mxu0 0
        %962 = vmatpush1.bf16.msra.mxu0 0
        %963 = vmatprep.subr.bf16.mxu0 0
        %964 = vmatpush1.bf16.msra.mxu0 0
        %965 = vmatprep.subr.bf16.mxu0 0
        %966 = vmatpush1.bf16.msra.mxu0 0
        %967 = vmatprep.subr.bf16.mxu0 0
        %968 = vmatpush1.bf16.msra.mxu0 0
        %969 = vmatprep.subr.bf16.mxu0 0
        %970 = vmatpush1.bf16.msra.mxu0 0
        %971 = vmatprep.subr.bf16.mxu0 0
        %972 = vmatpush1.bf16.msra.mxu0 0
        %973 = vmatprep.subr.bf16.mxu0 0
        %974 = vmatpush1.bf16.msra.mxu0 0
        %975 = vmatprep.subr.bf16.mxu0 0
        %976 = vmatpush1.bf16.msra.mxu0 0
        %977 = vmatprep.mubr.bf16.mxu0 0
        %978 = vmatmul.mubr.bf16.gmra.mrb[0].mxu0 %v943
        %v979 = vpop.f32.mrb[0].mxu0
        %v980 = vadd.f32 0.0, %v979
        %v981 = vpop.f32.mrb[0].mxu0
        %v982 = vpop.f32.mrb[0].mxu0
        %v983 = vadd.f32 0.0, %v982
        %v984 = vpop.f32.mrb[0].mxu0
        %985 = vdwg.mxu0
        %v986 = vpack.c.bf16 %v412, %v408
        %v987 = vpack.c.bf16 %v455, %v451
        %v988 = vpack.c.bf16 %v498, %v494
        %v990 = vsel %vm367, %v986, 0
        %v993 = vsel %vm367, %v987, 0
        %995 = vmatprep.subr.bf16.mxu0 0
        %996 = vmatpush1.bf16.xpose.msra.mxu0 %v993
        %997 = vmatprep.subr.bf16.mxu0 0
        %998 = vmatpush1.bf16.xpose.msra.mxu0 0
        %999 = vmatprep.subr.bf16.mxu0 0
        %1000 = vmatpush1.bf16.xpose.msra.mxu0 0
        %1001 = vmatprep.subr.bf16.mxu0 0
        %1002 = vmatpush1.bf16.xpose.msra.mxu0 0
        %1003 = vmatprep.subr.bf16.mxu0 0
        %1004 = vmatpush1.bf16.xpose.msra.mxu0 0
        %1005 = vmatprep.subr.bf16.mxu0 0
        %1006 = vmatpush1.bf16.xpose.msra.mxu0 0
        %1007 = vmatprep.subr.bf16.mxu0 0
        %1008 = vmatpush1.bf16.xpose.msra.mxu0 0
        %1009 = vmatprep.subr.bf16.mxu0 0
        %1010 = vmatpush1.bf16.xpose.msra.mxu0 0
        %1011 = vmatprep.subr.bf16.mxu0 0
        %1012 = vmatpush1.bf16.xpose.msra.mxu0 0
        %1013 = vmatprep.subr.bf16.mxu0 0
        %1014 = vmatpush1.bf16.xpose.msra.mxu0 0
        %1015 = vmatprep.subr.bf16.mxu0 0
        %1016 = vmatpush1.bf16.xpose.msra.mxu0 0
        %1017 = vmatprep.subr.bf16.mxu0 0
        %1018 = vmatpush1.bf16.xpose.msra.mxu0 0
        %1019 = vmatprep.subr.bf16.mxu0 0
        %1020 = vmatpush1.bf16.xpose.msra.mxu0 0
        %1021 = vmatprep.subr.bf16.mxu0 0
        %1022 = vmatpush1.bf16.xpose.msra.mxu0 0
        %1023 = vmatprep.subr.bf16.mxu0 0
        %1024 = vmatpush1.bf16.xpose.msra.mxu0 0
        %1025 = vmatprep.subr.bf16.mxu0 0
        %1026 = vmatpush1.bf16.xpose.msra.mxu0 0
        %1027 = vmatprep.mubr.bf16.mxu0 0
        %1028 = vmatmul.mubr.bf16.gmra.mrb[0].mxu0 %v990
        %v1029 = vpop.f32.mrb[0].mxu0
        %v1030 = vadd.f32 %v500, %v1029
        %v1031 = vpop.f32.mrb[0].mxu0
        %v1032 = vpop.f32.mrb[0].mxu0
        %v1033 = vadd.f32 %v501, %v1032
        %v1034 = vpop.f32.mrb[0].mxu0
        %1035 = vdwg.mxu0
        %v1036 = vsel %vm552, %v1030, -inf
        %1037 = vmax.xlane.f32.xlu0 %v1036
        %v1038 = vpop.xlane.xlu0 %1037
        %v1039 = vsel %vm552, %v1033, -inf
        %1040 = vmax.xlane.f32.xlu0 %v1039
        %v1041 = vpop.xlane.xlu0 %1040
        %v1042 = vsub.f32 %v1030, %v1038
        %v1043 = vsub.f32 %v1033, %v1041
        %v1044 = vmul.f32 %v1042, 1.442695
        %v1045 = vpow.pop %v1044
        %v1046 = vmul.f32 %v1043, 1.442695
        %v1047 = vpow.pop %v1046
        %v1048 = vsel %vm552, %v1045, 0.0
        %1049 = vadd.xlane.f32.xlu0 %v1048
        %v1050 = vpop.xlane.xlu0 %1049
        %v1051 = vsel %vm552, %v1047, 0.0
        %1052 = vadd.xlane.f32.xlu0 %v1051
        %v1053 = vpop.xlane.xlu0 %1052
        %v1054 = vrcp.pop %v1050
        %v1055 = vrcp.pop %v1053
        %v1056 = vmul.f32 %v1045, %v1054
        %v1057 = vmul.f32 %v1047, %v1055
        %v1058 = vpack.c.bf16 %v1057, %v1056
        %v1060 = vsel %vm552, %v1058, 0
        %1062 = vmatprep.subr.bf16.mxu0 0
        %1063 = vmatpush1.bf16.msra.mxu0 %v988
        %1064 = vmatprep.subr.bf16.mxu0 0
        %1065 = vmatpush1.bf16.msra.mxu0 0
        %1066 = vmatprep.subr.bf16.mxu0 0
        %1067 = vmatpush1.bf16.msra.mxu0 0
        %1068 = vmatprep.subr.bf16.mxu0 0
        %1069 = vmatpush1.bf16.msra.mxu0 0
        %1070 = vmatprep.subr.bf16.mxu0 0
        %1071 = vmatpush1.bf16.msra.mxu0 0
        %1072 = vmatprep.subr.bf16.mxu0 0
        %1073 = vmatpush1.bf16.msra.mxu0 0
        %1074 = vmatprep.subr.bf16.mxu0 0
        %1075 = vmatpush1.bf16.msra.mxu0 0
        %1076 = vmatprep.subr.bf16.mxu0 0
        %1077 = vmatpush1.bf16.msra.mxu0 0
        %1078 = vmatprep.subr.bf16.mxu0 0
        %1079 = vmatpush1.bf16.msra.mxu0 0
        %1080 = vmatprep.subr.bf16.mxu0 0
        %1081 = vmatpush1.bf16.msra.mxu0 0
        %1082 = vmatprep.subr.bf16.mxu0 0
        %1083 = vmatpush1.bf16.msra.mxu0 0
        %1084 = vmatprep.subr.bf16.mxu0 0
        %1085 = vmatpush1.bf16.msra.mxu0 0
        %1086 = vmatprep.subr.bf16.mxu0 0
        %1087 = vmatpush1.bf16.msra.mxu0 0
        %1088 = vmatprep.subr.bf16.mxu0 0
        %1089 = vmatpush1.bf16.msra.mxu0 0
        %1090 = vmatprep.subr.bf16.mxu0 0
        %1091 = vmatpush1.bf16.msra.mxu0 0
        %1092 = vmatprep.subr.bf16.mxu0 0
        %1093 = vmatpush1.bf16.msra.mxu0 0
        %1094 = vmatprep.mubr.bf16.mxu0 0
        %1095 = vmatmul.mubr.bf16.gmra.mrb[0].mxu0 %v1060
        %v1096 = vpop.f32.mrb[0].mxu0
        %v1097 = vadd.f32 0.0, %v1096
        %v1098 = vpop.f32.mrb[0].mxu0
        %v1099 = vpop.f32.mrb[0].mxu0
        %v1100 = vadd.f32 0.0, %v1099
        %v1101 = vpop.f32.mrb[0].mxu0
        %1102 = vdwg.mxu0
        %1104 = vrot.lane.b32.xlu0 %v986, 96
        %v1105 = vpop.permute.xlu0 %1104
        %1107 = vrot.lane.b32.xlu0 %v987, 96
        %v1108 = vpop.permute.xlu0 %1107
        %v1110 = vsel %vm367, %v1105, 0
        %v1113 = vsel %vm367, %v1108, 0
        %1115 = vmatprep.subr.bf16.mxu0 0
        %1116 = vmatpush1.bf16.xpose.msra.mxu0 %v1113
        %1117 = vmatprep.subr.bf16.mxu0 0
        %1118 = vmatpush1.bf16.xpose.msra.mxu0 0
        %1119 = vmatprep.subr.bf16.mxu0 0
        %1120 = vmatpush1.bf16.xpose.msra.mxu0 0
        %1121 = vmatprep.subr.bf16.mxu0 0
        %1122 = vmatpush1.bf16.xpose.msra.mxu0 0
        %1123 = vmatprep.subr.bf16.mxu0 0
        %1124 = vmatpush1.bf16.xpose.msra.mxu0 0
        %1125 = vmatprep.subr.bf16.mxu0 0
        %1126 = vmatpush1.bf16.xpose.msra.mxu0 0
        %1127 = vmatprep.subr.bf16.mxu0 0
        %1128 = vmatpush1.bf16.xpose.msra.mxu0 0
        %1129 = vmatprep.subr.bf16.mxu0 0
        %1130 = vmatpush1.bf16.xpose.msra.mxu0 0
        %1131 = vmatprep.subr.bf16.mxu0 0
        %1132 = vmatpush1.bf16.xpose.msra.mxu0 0
        %1133 = vmatprep.subr.bf16.mxu0 0
        %1134 = vmatpush1.bf16.xpose.msra.mxu0 0
        %1135 = vmatprep.subr.bf16.mxu0 0
        %1136 = vmatpush1.bf16.xpose.msra.mxu0 0
        %1137 = vmatprep.subr.bf16.mxu0 0
        %1138 = vmatpush1.bf16.xpose.msra.mxu0 0
        %1139 = vmatprep.subr.bf16.mxu0 0
        %1140 = vmatpush1.bf16.xpose.msra.mxu0 0
        %1141 = vmatprep.subr.bf16.mxu0 0
        %1142 = vmatpush1.bf16.xpose.msra.mxu0 0
        %1143 = vmatprep.subr.bf16.mxu0 0
        %1144 = vmatpush1.bf16.xpose.msra.mxu0 0
        %1145 = vmatprep.subr.bf16.mxu0 0
        %1146 = vmatpush1.bf16.xpose.msra.mxu0 0
        %1147 = vmatprep.mubr.bf16.mxu0 0
        %1148 = vmatmul.mubr.bf16.gmra.mrb[0].mxu0 %v1110
        %v1149 = vpop.f32.mrb[0].mxu0
        %v1150 = vadd.f32 %v500, %v1149
        %v1151 = vpop.f32.mrb[0].mxu0
        %v1152 = vpop.f32.mrb[0].mxu0
        %v1153 = vadd.f32 %v501, %v1152
        %v1154 = vpop.f32.mrb[0].mxu0
        %1155 = vdwg.mxu0
        %v1156 = vsel %vm552, %v1150, -inf
        %1157 = vmax.xlane.f32.xlu0 %v1156
        %v1158 = vpop.xlane.xlu0 %1157
        %v1159 = vsel %vm552, %v1153, -inf
        %1160 = vmax.xlane.f32.xlu0 %v1159
        %v1161 = vpop.xlane.xlu0 %1160
        %v1162 = vsub.f32 %v1150, %v1158
        %v1163 = vsub.f32 %v1153, %v1161
        %v1164 = vmul.f32 %v1162, 1.442695
        %v1165 = vpow.pop %v1164
        %v1166 = vmul.f32 %v1163, 1.442695
        %v1167 = vpow.pop %v1166
        %v1168 = vsel %vm552, %v1165, 0.0
        %1169 = vadd.xlane.f32.xlu0 %v1168
        %v1170 = vpop.xlane.xlu0 %1169
        %v1171 = vsel %vm552, %v1167, 0.0
        %1172 = vadd.xlane.f32.xlu0 %v1171
        %v1173 = vpop.xlane.xlu0 %1172
        %v1174 = vrcp.pop %v1170
        %v1175 = vrcp.pop %v1173
        %v1176 = vmul.f32 %v1165, %v1174
        %v1177 = vmul.f32 %v1167, %v1175
        %v1178 = vpack.c.bf16 %v1177, %v1176
        %1180 = vrot.lane.b32.xlu0 %v988, 96
        %v1181 = vpop.permute.xlu0 %1180
        %v1184 = vsel %vm552, %v1178, 0
        %1186 = vmatprep.subr.bf16.mxu0 0
        %1187 = vmatpush1.bf16.msra.mxu0 %v1181
        %1188 = vmatprep.subr.bf16.mxu0 0
        %1189 = vmatpush1.bf16.msra.mxu0 0
        %1190 = vmatprep.subr.bf16.mxu0 0
        %1191 = vmatpush1.bf16.msra.mxu0 0
        %1192 = vmatprep.subr.bf16.mxu0 0
        %1193 = vmatpush1.bf16.msra.mxu0 0
        %1194 = vmatprep.subr.bf16.mxu0 0
        %1195 = vmatpush1.bf16.msra.mxu0 0
        %1196 = vmatprep.subr.bf16.mxu0 0
        %1197 = vmatpush1.bf16.msra.mxu0 0
        %1198 = vmatprep.subr.bf16.mxu0 0
        %1199 = vmatpush1.bf16.msra.mxu0 0
        %1200 = vmatprep.subr.bf16.mxu0 0
        %1201 = vmatpush1.bf16.msra.mxu0 0
        %1202 = vmatprep.subr.bf16.mxu0 0
        %1203 = vmatpush1.bf16.msra.mxu0 0
        %1204 = vmatprep.subr.bf16.mxu0 0
        %1205 = vmatpush1.bf16.msra.mxu0 0
        %1206 = vmatprep.subr.bf16.mxu0 0
        %1207 = vmatpush1.bf16.msra.mxu0 0
        %1208 = vmatprep.subr.bf16.mxu0 0
        %1209 = vmatpush1.bf16.msra.mxu0 0
        %1210 = vmatprep.subr.bf16.mxu0 0
        %1211 = vmatpush1.bf16.msra.mxu0 0
        %1212 = vmatprep.subr.bf16.mxu0 0
        %1213 = vmatpush1.bf16.msra.mxu0 0
        %1214 = vmatprep.subr.bf16.mxu0 0
        %1215 = vmatpush1.bf16.msra.mxu0 0
        %1216 = vmatprep.subr.bf16.mxu0 0
        %1217 = vmatpush1.bf16.msra.mxu0 0
        %1218 = vmatprep.mubr.bf16.mxu0 0
        %1219 = vmatmul.mubr.bf16.gmra.mrb[0].mxu0 %v1184
        %v1220 = vpop.f32.mrb[0].mxu0
        %v1221 = vadd.f32 0.0, %v1220
        %v1222 = vpop.f32.mrb[0].mxu0
        %v1223 = vpop.f32.mrb[0].mxu0
        %v1224 = vadd.f32 0.0, %v1223
        %v1225 = vpop.f32.mrb[0].mxu0
        %1226 = vdwg.mxu0
        %1227 = vrot.lane.b32.xlu0 %v986, 64
        %v1228 = vpop.permute.xlu0 %1227
        %1229 = vrot.lane.b32.xlu0 %v987, 64
        %v1230 = vpop.permute.xlu0 %1229
        %v1232 = vsel %vm367, %v1228, 0
        %v1235 = vsel %vm367, %v1230, 0
        %1237 = vmatprep.subr.bf16.mxu0 0
        %1238 = vmatpush1.bf16.xpose.msra.mxu0 %v1235
        %1239 = vmatprep.subr.bf16.mxu0 0
        %1240 = vmatpush1.bf16.xpose.msra.mxu0 0
        %1241 = vmatprep.subr.bf16.mxu0 0
        %1242 = vmatpush1.bf16.xpose.msra.mxu0 0
        %1243 = vmatprep.subr.bf16.mxu0 0
        %1244 = vmatpush1.bf16.xpose.msra.mxu0 0
        %1245 = vmatprep.subr.bf16.mxu0 0
        %1246 = vmatpush1.bf16.xpose.msra.mxu0 0
        %1247 = vmatprep.subr.bf16.mxu0 0
        %1248 = vmatpush1.bf16.xpose.msra.mxu0 0
        %1249 = vmatprep.subr.bf16.mxu0 0
        %1250 = vmatpush1.bf16.xpose.msra.mxu0 0
        %1251 = vmatprep.subr.bf16.mxu0 0
        %1252 = vmatpush1.bf16.xpose.msra.mxu0 0
        %1253 = vmatprep.subr.bf16.mxu0 0
        %1254 = vmatpush1.bf16.xpose.msra.mxu0 0
        %1255 = vmatprep.subr.bf16.mxu0 0
        %1256 = vmatpush1.bf16.xpose.msra.mxu0 0
        %1257 = vmatprep.subr.bf16.mxu0 0
        %1258 = vmatpush1.bf16.xpose.msra.mxu0 0
        %1259 = vmatprep.subr.bf16.mxu0 0
        %1260 = vmatpush1.bf16.xpose.msra.mxu0 0
        %1261 = vmatprep.subr.bf16.mxu0 0
        %1262 = vmatpush1.bf16.xpose.msra.mxu0 0
        %1263 = vmatprep.subr.bf16.mxu0 0
        %1264 = vmatpush1.bf16.xpose.msra.mxu0 0
        %1265 = vmatprep.subr.bf16.mxu0 0
        %1266 = vmatpush1.bf16.xpose.msra.mxu0 0
        %1267 = vmatprep.subr.bf16.mxu0 0
        %1268 = vmatpush1.bf16.xpose.msra.mxu0 0
        %1269 = vmatprep.mubr.bf16.mxu0 0
        %1270 = vmatmul.mubr.bf16.gmra.mrb[0].mxu0 %v1232
        %v1271 = vpop.f32.mrb[0].mxu0
        %v1272 = vadd.f32 %v500, %v1271
        %v1273 = vpop.f32.mrb[0].mxu0
        %v1274 = vpop.f32.mrb[0].mxu0
        %v1275 = vadd.f32 %v501, %v1274
        %v1276 = vpop.f32.mrb[0].mxu0
        %1277 = vdwg.mxu0
        %v1278 = vsel %vm552, %v1272, -inf
        %1279 = vmax.xlane.f32.xlu0 %v1278
        %v1280 = vpop.xlane.xlu0 %1279
        %v1281 = vsel %vm552, %v1275, -inf
        %1282 = vmax.xlane.f32.xlu0 %v1281
        %v1283 = vpop.xlane.xlu0 %1282
        %v1284 = vsub.f32 %v1272, %v1280
        %v1285 = vsub.f32 %v1275, %v1283
        %v1286 = vmul.f32 %v1284, 1.442695
        %v1287 = vpow.pop %v1286
        %v1288 = vmul.f32 %v1285, 1.442695
        %v1289 = vpow.pop %v1288
        %v1290 = vsel %vm552, %v1287, 0.0
        %1291 = vadd.xlane.f32.xlu0 %v1290
        %v1292 = vpop.xlane.xlu0 %1291
        %v1293 = vsel %vm552, %v1289, 0.0
        %1294 = vadd.xlane.f32.xlu0 %v1293
        %v1295 = vpop.xlane.xlu0 %1294
        %v1296 = vrcp.pop %v1292
        %v1297 = vrcp.pop %v1295
        %v1298 = vmul.f32 %v1287, %v1296
        %v1299 = vmul.f32 %v1289, %v1297
        %v1300 = vpack.c.bf16 %v1299, %v1298
        %1301 = vrot.lane.b32.xlu0 %v988, 64
        %v1302 = vpop.permute.xlu0 %1301
        %v1305 = vsel %vm552, %v1300, 0
        %1307 = vmatprep.subr.bf16.mxu0 0
        %1308 = vmatpush1.bf16.msra.mxu0 %v1302
        %1309 = vmatprep.subr.bf16.mxu0 0
        %1310 = vmatpush1.bf16.msra.mxu0 0
        %1311 = vmatprep.subr.bf16.mxu0 0
        %1312 = vmatpush1.bf16.msra.mxu0 0
        %1313 = vmatprep.subr.bf16.mxu0 0
        %1314 = vmatpush1.bf16.msra.mxu0 0
        %1315 = vmatprep.subr.bf16.mxu0 0
        %1316 = vmatpush1.bf16.msra.mxu0 0
        %1317 = vmatprep.subr.bf16.mxu0 0
        %1318 = vmatpush1.bf16.msra.mxu0 0
        %1319 = vmatprep.subr.bf16.mxu0 0
        %1320 = vmatpush1.bf16.msra.mxu0 0
        %1321 = vmatprep.subr.bf16.mxu0 0
        %1322 = vmatpush1.bf16.msra.mxu0 0
        %1323 = vmatprep.subr.bf16.mxu0 0
        %1324 = vmatpush1.bf16.msra.mxu0 0
        %1325 = vmatprep.subr.bf16.mxu0 0
        %1326 = vmatpush1.bf16.msra.mxu0 0
        %1327 = vmatprep.subr.bf16.mxu0 0
        %1328 = vmatpush1.bf16.msra.mxu0 0
        %1329 = vmatprep.subr.bf16.mxu0 0
        %1330 = vmatpush1.bf16.msra.mxu0 0
        %1331 = vmatprep.subr.bf16.mxu0 0
        %1332 = vmatpush1.bf16.msra.mxu0 0
        %1333 = vmatprep.subr.bf16.mxu0 0
        %1334 = vmatpush1.bf16.msra.mxu0 0
        %1335 = vmatprep.subr.bf16.mxu0 0
        %1336 = vmatpush1.bf16.msra.mxu0 0
        %1337 = vmatprep.subr.bf16.mxu0 0
        %1338 = vmatpush1.bf16.msra.mxu0 0
        %1339 = vmatprep.mubr.bf16.mxu0 0
        %1340 = vmatmul.mubr.bf16.gmra.mrb[0].mxu0 %v1305
        %v1341 = vpop.f32.mrb[0].mxu0
        %v1342 = vadd.f32 0.0, %v1341
        %v1343 = vpop.f32.mrb[0].mxu0
        %v1344 = vpop.f32.mrb[0].mxu0
        %v1345 = vadd.f32 0.0, %v1344
        %v1346 = vpop.f32.mrb[0].mxu0
        %1347 = vdwg.mxu0
        %1348 = vrot.lane.b32.xlu0 %v986, 32
        %v1349 = vpop.permute.xlu0 %1348
        %1350 = vrot.lane.b32.xlu0 %v987, 32
        %v1351 = vpop.permute.xlu0 %1350
        %v1353 = vsel %vm367, %v1349, 0
        %v1356 = vsel %vm367, %v1351, 0
        %1358 = vmatprep.subr.bf16.mxu0 0
        %1359 = vmatpush1.bf16.xpose.msra.mxu0 %v1356
        %1360 = vmatprep.subr.bf16.mxu0 0
        %1361 = vmatpush1.bf16.xpose.msra.mxu0 0
        %1362 = vmatprep.subr.bf16.mxu0 0
        %1363 = vmatpush1.bf16.xpose.msra.mxu0 0
        %1364 = vmatprep.subr.bf16.mxu0 0
        %1365 = vmatpush1.bf16.xpose.msra.mxu0 0
        %1366 = vmatprep.subr.bf16.mxu0 0
        %1367 = vmatpush1.bf16.xpose.msra.mxu0 0
        %1368 = vmatprep.subr.bf16.mxu0 0
        %1369 = vmatpush1.bf16.xpose.msra.mxu0 0
        %1370 = vmatprep.subr.bf16.mxu0 0
        %1371 = vmatpush1.bf16.xpose.msra.mxu0 0
        %1372 = vmatprep.subr.bf16.mxu0 0
        %1373 = vmatpush1.bf16.xpose.msra.mxu0 0
        %1374 = vmatprep.subr.bf16.mxu0 0
        %1375 = vmatpush1.bf16.xpose.msra.mxu0 0
        %1376 = vmatprep.subr.bf16.mxu0 0
        %1377 = vmatpush1.bf16.xpose.msra.mxu0 0
        %1378 = vmatprep.subr.bf16.mxu0 0
        %1379 = vmatpush1.bf16.xpose.msra.mxu0 0
        %1380 = vmatprep.subr.bf16.mxu0 0
        %1381 = vmatpush1.bf16.xpose.msra.mxu0 0
        %1382 = vmatprep.subr.bf16.mxu0 0
        %1383 = vmatpush1.bf16.xpose.msra.mxu0 0
        %1384 = vmatprep.subr.bf16.mxu0 0
        %1385 = vmatpush1.bf16.xpose.msra.mxu0 0
        %1386 = vmatprep.subr.bf16.mxu0 0
        %1387 = vmatpush1.bf16.xpose.msra.mxu0 0
        %1388 = vmatprep.subr.bf16.mxu0 0
        %1389 = vmatpush1.bf16.xpose.msra.mxu0 0
        %1390 = vmatprep.mubr.bf16.mxu0 0
        %1391 = vmatmul.mubr.bf16.gmra.mrb[0].mxu0 %v1353
        %v1392 = vpop.f32.mrb[0].mxu0
        %v1393 = vadd.f32 %v500, %v1392
        %v1394 = vpop.f32.mrb[0].mxu0
        %v1395 = vpop.f32.mrb[0].mxu0
        %v1396 = vadd.f32 %v501, %v1395
        %v1397 = vpop.f32.mrb[0].mxu0
        %1398 = vdwg.mxu0
        %v1399 = vsel %vm552, %v1393, -inf
        %1400 = vmax.xlane.f32.xlu0 %v1399
        %v1401 = vpop.xlane.xlu0 %1400
        %v1402 = vsel %vm552, %v1396, -inf
        %1403 = vmax.xlane.f32.xlu0 %v1402
        %v1404 = vpop.xlane.xlu0 %1403
        %v1405 = vsub.f32 %v1393, %v1401
        %v1406 = vsub.f32 %v1396, %v1404
        %v1407 = vmul.f32 %v1405, 1.442695
        %v1408 = vpow.pop %v1407
        %v1409 = vmul.f32 %v1406, 1.442695
        %v1410 = vpow.pop %v1409
        %v1411 = vsel %vm552, %v1408, 0.0
        %1412 = vadd.xlane.f32.xlu0 %v1411
        %v1413 = vpop.xlane.xlu0 %1412
        %v1414 = vsel %vm552, %v1410, 0.0
        %1415 = vadd.xlane.f32.xlu0 %v1414
        %v1416 = vpop.xlane.xlu0 %1415
        %v1417 = vrcp.pop %v1413
        %v1418 = vrcp.pop %v1416
        %v1419 = vmul.f32 %v1408, %v1417
        %v1420 = vmul.f32 %v1410, %v1418
        %v1421 = vpack.c.bf16 %v1420, %v1419
        %1422 = vrot.lane.b32.xlu0 %v988, 32
        %v1423 = vpop.permute.xlu0 %1422
        %v1426 = vsel %vm552, %v1421, 0
        %1428 = vmatprep.subr.bf16.mxu0 0
        %1429 = vmatpush1.bf16.msra.mxu0 %v1423
        %1430 = vmatprep.subr.bf16.mxu0 0
        %1431 = vmatpush1.bf16.msra.mxu0 0
        %1432 = vmatprep.subr.bf16.mxu0 0
        %1433 = vmatpush1.bf16.msra.mxu0 0
        %1434 = vmatprep.subr.bf16.mxu0 0
        %1435 = vmatpush1.bf16.msra.mxu0 0
        %1436 = vmatprep.subr.bf16.mxu0 0
        %1437 = vmatpush1.bf16.msra.mxu0 0
        %1438 = vmatprep.subr.bf16.mxu0 0
        %1439 = vmatpush1.bf16.msra.mxu0 0
        %1440 = vmatprep.subr.bf16.mxu0 0
        %1441 = vmatpush1.bf16.msra.mxu0 0
        %1442 = vmatprep.subr.bf16.mxu0 0
        %1443 = vmatpush1.bf16.msra.mxu0 0
        %1444 = vmatprep.subr.bf16.mxu0 0
        %1445 = vmatpush1.bf16.msra.mxu0 0
        %1446 = vmatprep.subr.bf16.mxu0 0
        %1447 = vmatpush1.bf16.msra.mxu0 0
        %1448 = vmatprep.subr.bf16.mxu0 0
        %1449 = vmatpush1.bf16.msra.mxu0 0
        %1450 = vmatprep.subr.bf16.mxu0 0
        %1451 = vmatpush1.bf16.msra.mxu0 0
        %1452 = vmatprep.subr.bf16.mxu0 0
        %1453 = vmatpush1.bf16.msra.mxu0 0
        %1454 = vmatprep.subr.bf16.mxu0 0
        %1455 = vmatpush1.bf16.msra.mxu0 0
        %1456 = vmatprep.subr.bf16.mxu0 0
        %1457 = vmatpush1.bf16.msra.mxu0 0
        %1458 = vmatprep.subr.bf16.mxu0 0
        %1459 = vmatpush1.bf16.msra.mxu0 0
        %1460 = vmatprep.mubr.bf16.mxu0 0
        %1461 = vmatmul.mubr.bf16.gmra.mrb[0].mxu0 %v1426
        %v1462 = vpop.f32.mrb[0].mxu0
        %v1463 = vadd.f32 0.0, %v1462
        %v1464 = vpop.f32.mrb[0].mxu0
        %v1465 = vpop.f32.mrb[0].mxu0
        %v1466 = vadd.f32 0.0, %v1465
        %v1467 = vpop.f32.mrb[0].mxu0
        %1468 = vdwg.mxu0
        %1471 = vrot.lane.b32.xlu0 %v738, 32
        %v1472 = vpop.permute.xlu0 %1471
        %1473 = vrot.lane.b32.xlu0 %v741, 32
        %v1474 = vpop.permute.xlu0 %1473
        %1479 = vrot.lane.b32.xlu0 %v859, 64
        %v1480 = vpop.permute.xlu0 %1479
        %1481 = vrot.lane.b32.xlu0 %v862, 64
        %v1482 = vpop.permute.xlu0 %1481
        %1487 = vrot.lane.b32.xlu0 %v980, 96
        %v1488 = vpop.permute.xlu0 %1487
        %1489 = vrot.lane.b32.xlu0 %v983, 96
        %v1490 = vpop.permute.xlu0 %1489
        %1495 = vrot.lane.b32.xlu0 %v1221, 32
        %v1496 = vpop.permute.xlu0 %1495
        %1497 = vrot.lane.b32.xlu0 %v1224, 32
        %v1498 = vpop.permute.xlu0 %1497
        %1503 = vrot.lane.b32.xlu0 %v1342, 64
        %v1504 = vpop.permute.xlu0 %1503
        %1505 = vrot.lane.b32.xlu0 %v1345, 64
        %v1506 = vpop.permute.xlu0 %1505
        %1511 = vrot.lane.b32.xlu0 %v1463, 96
        %v1512 = vpop.permute.xlu0 %1511
        %1513 = vrot.lane.b32.xlu0 %v1466, 96
        %v1514 = vpop.permute.xlu0 %1513
        %v1517 = vsel %vm367, %v614, %v1472
        %v1518 = vsel %vm367, %v617, %v1474
        %vm1519 = vcmask 523264
        %v1520 = vsel %vm1519, %v1517, %v1480
        %v1521 = vsel %vm1519, %v1518, %v1482
        %vm1522 = vcmask 785408
        %v1523 = vsel %vm1522, %v1520, %v1488
        %v1524 = vsel %vm1522, %v1521, %v1490
        %v1525 = vsel %vm367, %v1097, %v1496
        %v1526 = vsel %vm367, %v1100, %v1498
        %v1527 = vsel %vm1519, %v1525, %v1504
        %v1528 = vsel %vm1519, %v1526, %v1506
        %v1529 = vsel %vm1522, %v1527, %v1512
        %v1530 = vsel %vm1522, %v1528, %v1514
        %v1531 = vpack.c.bf16 %v1524, %v1523
        %v1532 = vpack.c.bf16 %v1530, %v1529
        %v1533 = vld [vmem:[#allocation8] sm:$0xf]
        %v1534 = vld [vmem:[#allocation8 + $0x4] sm:$0xf]
        %v1535 = vld [vmem:[#allocation8 + $0x8] sm:$0xf]
        %v1536 = vld [vmem:[#allocation8 + $0xc] sm:$0xf]
        %v1537 = vld [vmem:[#allocation8 + $0x10] sm:$0xf]
        %v1538 = vld [vmem:[#allocation8 + $0x14] sm:$0xf]
        %v1539 = vld [vmem:[#allocation8 + $0x18] sm:$0xf]
        %v1540 = vld [vmem:[#allocation8 + $0x1c] sm:$0xf]
        %v1541 = vld [vmem:[#allocation8 + $0x20] sm:$0xf]
        %v1542 = vld [vmem:[#allocation8 + $0x24] sm:$0xf]
        %v1543 = vld [vmem:[#allocation8 + $0x28] sm:$0xf]
        %v1544 = vld [vmem:[#allocation8 + $0x2c] sm:$0xf]
        %v1545 = vld [vmem:[#allocation8 + $0x30] sm:$0xf]
        %v1546 = vld [vmem:[#allocation8 + $0x34] sm:$0xf]
        %v1547 = vld [vmem:[#allocation8 + $0x38] sm:$0xf]
        %v1548 = vld [vmem:[#allocation8 + $0x3c] sm:$0xf]
        %v1549 = vld [vmem:[#allocation8 + $0x40] sm:$0xf]
        %v1550 = vld [vmem:[#allocation8 + $0x44] sm:$0xf]
        %v1551 = vld [vmem:[#allocation8 + $0x48] sm:$0xf]
        %v1552 = vld [vmem:[#allocation8 + $0x4c] sm:$0xf]
        %v1553 = vld [vmem:[#allocation8 + $0x50] sm:$0xf]
        %v1554 = vld [vmem:[#allocation8 + $0x54] sm:$0xf]
        %v1555 = vld [vmem:[#allocation8 + $0x58] sm:$0xf]
        %v1556 = vld [vmem:[#allocation8 + $0x5c] sm:$0xf]
        %v1557 = vld [vmem:[#allocation8 + $0x60] sm:$0xf]
        %v1558 = vld [vmem:[#allocation8 + $0x64] sm:$0xf]
        %v1559 = vld [vmem:[#allocation8 + $0x68] sm:$0xf]
        %v1560 = vld [vmem:[#allocation8 + $0x6c] sm:$0xf]
        %v1561 = vld [vmem:[#allocation8 + $0x70] sm:$0xf]
        %v1562 = vld [vmem:[#allocation8 + $0x74] sm:$0xf]
        %v1563 = vld [vmem:[#allocation8 + $0x78] sm:$0xf]
        %v1564 = vld [vmem:[#allocation8 + $0x7c] sm:$0xf]
        %v1565 = vld [vmem:[%s4] sm:$0x1]
        %v1567 = vlaneseq
        %v1568 = vshrl.u32 %v1567, 7
        %v1569 = vsub.s32 0, %v1568
        %v1570 = vrot.slane %v1565, %v1569
        %v1604 = vunpack.c.l.b16 %v1533
        %v1605 = vunpack.c.l.b16 %v1534
        %v1606 = vunpack.c.l.b16 %v1535
        %v1607 = vunpack.c.l.b16 %v1536
        %v1608 = vunpack.c.l.b16 %v1537
        %v1609 = vunpack.c.l.b16 %v1538
        %v1610 = vunpack.c.l.b16 %v1539
        %v1611 = vunpack.c.l.b16 %v1540
        %v1612 = vunpack.c.l.b16 %v1541
        %v1613 = vunpack.c.l.b16 %v1542
        %v1614 = vunpack.c.l.b16 %v1543
        %v1615 = vunpack.c.l.b16 %v1544
        %v1616 = vunpack.c.l.b16 %v1545
        %v1617 = vunpack.c.l.b16 %v1546
        %v1618 = vunpack.c.l.b16 %v1547
        %v1619 = vunpack.c.l.b16 %v1548
        %v1620 = vunpack.c.l.b16 %v1549
        %v1621 = vunpack.c.l.b16 %v1550
        %v1622 = vunpack.c.l.b16 %v1551
        %v1623 = vunpack.c.l.b16 %v1552
        %v1624 = vunpack.c.l.b16 %v1553
        %v1625 = vunpack.c.l.b16 %v1554
        %v1626 = vunpack.c.l.b16 %v1555
        %v1627 = vunpack.c.l.b16 %v1556
        %v1628 = vunpack.c.l.b16 %v1557
        %v1629 = vunpack.c.l.b16 %v1558
        %v1630 = vunpack.c.l.b16 %v1559
        %v1631 = vunpack.c.l.b16 %v1560
        %v1632 = vunpack.c.l.b16 %v1561
        %v1633 = vunpack.c.l.b16 %v1562
        %v1634 = vunpack.c.l.b16 %v1563
        %v1635 = vunpack.c.l.b16 %v1564
        %v1636 = vpack.c.b16 %v1605, %v1604
        %v1637 = vpack.c.b16 %v1607, %v1606
        %v1638 = vpack.c.b16 %v1609, %v1608
        %v1639 = vpack.c.b16 %v1611, %v1610
        %v1640 = vpack.c.b16 %v1613, %v1612
        %v1641 = vpack.c.b16 %v1615, %v1614
        %v1642 = vpack.c.b16 %v1617, %v1616
        %v1643 = vpack.c.b16 %v1619, %v1618
        %v1644 = vpack.c.b16 %v1621, %v1620
        %v1645 = vpack.c.b16 %v1623, %v1622
        %v1646 = vpack.c.b16 %v1625, %v1624
        %v1647 = vpack.c.b16 %v1627, %v1626
        %v1648 = vpack.c.b16 %v1629, %v1628
        %v1649 = vpack.c.b16 %v1631, %v1630
        %v1650 = vpack.c.b16 %v1633, %v1632
        %v1651 = vpack.c.b16 %v1635, %v1634
        %1668 = vmatprep.subr.bf16.mxu0 0
        %1669 = vmatpush1.bf16.msra.mxu0 %v1636
        %1670 = vmatprep.subr.bf16.mxu0 0
        %1671 = vmatpush1.bf16.msra.mxu0 %v1637
        %1672 = vmatprep.subr.bf16.mxu0 0
        %1673 = vmatpush1.bf16.msra.mxu0 %v1638
        %1674 = vmatprep.subr.bf16.mxu0 0
        %1675 = vmatpush1.bf16.msra.mxu0 %v1639
        %1676 = vmatprep.subr.bf16.mxu0 0
        %1677 = vmatpush1.bf16.msra.mxu0 %v1640
        %1678 = vmatprep.subr.bf16.mxu0 0
        %1679 = vmatpush1.bf16.msra.mxu0 %v1641
        %1680 = vmatprep.subr.bf16.mxu0 0
        %1681 = vmatpush1.bf16.msra.mxu0 %v1642
        %1682 = vmatprep.subr.bf16.mxu0 0
        %1683 = vmatpush1.bf16.msra.mxu0 %v1643
        %1684 = vmatprep.subr.bf16.mxu0 0
        %1685 = vmatpush1.bf16.msra.mxu0 %v1644
        %1686 = vmatprep.subr.bf16.mxu0 0
        %1687 = vmatpush1.bf16.msra.mxu0 %v1645
        %1688 = vmatprep.subr.bf16.mxu0 0
        %1689 = vmatpush1.bf16.msra.mxu0 %v1646
        %1690 = vmatprep.subr.bf16.mxu0 0
        %1691 = vmatpush1.bf16.msra.mxu0 %v1647
        %1692 = vmatprep.subr.bf16.mxu0 0
        %1693 = vmatpush1.bf16.msra.mxu0 %v1648
        %1694 = vmatprep.subr.bf16.mxu0 0
        %1695 = vmatpush1.bf16.msra.mxu0 %v1649
        %1696 = vmatprep.subr.bf16.mxu0 0
        %1697 = vmatpush1.bf16.msra.mxu0 %v1650
        %1698 = vmatprep.subr.bf16.mxu0 0
        %1699 = vmatpush1.bf16.msra.mxu0 %v1651
        %1700 = vmatprep.mubr.bf16.mxu0 %v1532
        %1701 = vmatmul.mubr.bf16.gmra.mrb[0].mxu0 %v1531
        %v1702 = vpop.f32.mrb[0].mxu0
        %v1703 = vadd.f32 %v1570, %v1702
        %v1704 = vpop.f32.mrb[0].mxu0
        %v1705 = vpop.f32.mrb[0].mxu0
        %v1706 = vadd.f32 %v1570, %v1705
        %v1707 = vpop.f32.mrb[0].mxu0
        %1708 = vdwg.mxu0
        %1709 = vst [vmem:[%s286] sm:$0xff] %v1703
        %1710 = vst [vmem:[%s286 + $0x8] sm:$0xff] %v1706
        %s1711 = sand.u32 %s142, 1
        %s1712 = scalar_lea.sflag [#allocation4], %s1711
        %s1713 = sand.u32 %s142, 1
        %s1714 = smul.addr %s1713, 16
        %s1715 = scalar_lea.vmem [#allocation10], %s1714
        // Predicated region
        $region57: #{tpu_custom_call.1} parent=39 // pred_check
          %p1716 = pneg %p152
        $region58: #{tpu_custom_call.1} parent=39 // pred_check_branch
          %1718 = sbr.rel (%p1716) target = $region60
        $region59: #{tpu_custom_call.1} parent=39 // pred_region
          %s1720 = ssub.s32 256, 256
          %1721 = vsyncadd %s1712, %s1720
          %s1722 = smul.addr %s24, 2
          %s1723 = smul.addr %s1722, 128
          %s1724 = scalar_lea.hbm %s5, %s1723
          %s1725 = sshll.u32 %s1715, 4
          %s1726 = int_to_ptr.vmem [resolvable:$true] %s1725
          %1731 = dma.vmem_to_hbm [thread:$0]  %s1726, 256, %s1724, %s1712, 128, 128, 8
        $region60: #{tpu_custom_call.1} parent=39 // pred_fallthru
          _
      $region40: #{tpu_custom_call.1} parent=5 // pred_fallthru
        _
      %p1732 = scmp.le.s32.totalorder 2, %s19
      // Predicated region
      $region61: #{tpu_custom_call.1} parent=5 // pred_check
        %p1733 = pneg %p1732
      $region62: #{tpu_custom_call.1} parent=5 // pred_check_branch
        %1735 = sbr.rel (%p1733) target = $region64
      $region63: #{tpu_custom_call.1} parent=5 // pred_region
        %s1736 = ssub.s32 %s19, 2
        // Predicated region
        $region65: #{tpu_custom_call.1} parent=63 // pred_check
          %p1737 = pneg %p158
        $region66: #{tpu_custom_call.1} parent=63 // pred_check_branch
          %1739 = sbr.rel (%p1737) target = $region68
        $region67: #{tpu_custom_call.1} parent=63 // pred_region
          %s1740 = sand.u32 %s143, 1
          %s1741 = scalar_lea.sflag [#allocation4], %s1740
          %s1742 = sand.u32 %s143, 1
          %s1743 = smul.addr %s1742, 16
          %s1744 = scalar_lea.vmem [#allocation10], %s1743
          %1745 = dma.done %s1741, 256
        $region68: #{tpu_custom_call.1} parent=63 // pred_fallthru
          _
      $region64: #{tpu_custom_call.1} parent=5 // pred_fallthru
        _
    $region6: #{tpu_custom_call.1} parent=1 // loop_footer
      %s23 = sadd.s32 1, %s19
    $region7: #{tpu_custom_call.1} parent=1 // loop_footer_branch
      %18 = sbr.rel target = $region3
    $region8: #{tpu_custom_call.1} parent=1 // loop_exit
      _
    %1746 = vsyncpa [#allocation3], 1
    %s1747 = scalar_lea.sflag [#allocation3], 1
    %1748 = vsyncpa %s1747, 1
    %1749 = vsyncpa [#allocation6], 1
    %1750 = vsyncpa [#allocation9], 1
    %1751 = vsyncpa [#allocation4], 1
    %s1752 = scalar_lea.sflag [#allocation4], 1
    %1753 = vsyncpa %s1752, 1

</llo_original>
